<compile_context>
chip_gen: v6e
topology: v6e:2x2x1
jax: 0.10.0
libtpu: 0.0.40
codegen_flags: <defaults>
</compile_context>

<pallas_src>
import numpy as np

import jax
import jax.numpy as jnp
from jax import lax
from jax.experimental import pallas as pl
from jax.experimental.pallas import tpu as pltpu


def _cdiv(a, b):
    return -(-a // b)


def _pad_to(x, m):
    return _cdiv(x, m) * m


def _vmem_cap_bytes():
    # v5e/v6e have 128 MiB VMEM per core -> allow up to 64 MiB scoped VMEM.
    # v7x has only 64 MiB per TensorCore (and unknown chips): stay at 32 MiB.
    try:
        kind = jax.devices()[0].device_kind.lower()
    except Exception:
        kind = ""
    if ("v5 lite" in kind or "v5e" in kind or "v5litepod" in kind
            or "v6 lite" in kind or "v6e" in kind):
        return 64 << 20
    return 32 << 20


def _choose_tiling(num_groups, dim, lane):
    """Pick (groups per block, k-rows per block) so the ~6-copy RK4 live set fits the
    vreg file and v7x's two TensorCores both get work."""
    budget_rows = max(8, (192 * 1024) // (6 * lane * 4))
    if dim <= budget_rows:
        dim_tile = dim
        g_blk = max(1, min(num_groups, budget_rows // dim))
    else:
        g_blk = 1
        dim_tile = dim                       # full-dim fallback (always legal)
        cand = budget_rows - budget_rows % 8
        while cand >= 8:
            if dim % cand == 0:
                dim_tile = cand
                break
            cand -= 8
    # Prefer >= 2 grid steps whenever something can be split (v7x has 2 TensorCores).
    nblocks = _cdiv(num_groups, g_blk) * _cdiv(dim, dim_tile)
    if nblocks < 2:
        if g_blk > 1:
            g_blk = _cdiv(g_blk, 2)
        elif dim_tile >= 16 and dim_tile % 16 == 0:
            dim_tile //= 2
    return g_blk, dim_tile


def _make_kernel(nsteps, apply_input_bias, g_blk, dim_tile, lane, unroll):
    """Fused kernel: per-site Linear(2,1) bias + lane-packed, row-tiled RK4 loop."""
    rows = g_blk * dim_tile

    def kernel(dt_ref, z_ref, w0_ref, w1_ref, bb_ref, wode_ref, bode_ref, out_ref):
        zf = z_ref[...].astype(jnp.float32)          # (g_blk, n_feat, dim_tile, lane)
        if apply_input_bias:
            # Per-site Linear(2,1); weights already presented in (k, j) layout and
            # lane-tiled by the wrapper -> pure VPU elementwise work here.
            v3 = (w0_ref[...] * zf[:, 0]
                  + w1_ref[...] * zf[:, 1]
                  + bb_ref[...])                     # (g_blk, dim_tile, lane)
        else:
            v3 = zf[:, 0]                            # (g_blk, dim_tile, lane)

        # Leading-dim merge only (lane dim unchanged) -> layout no-op.  Each lane-packed
        # row holds P independent dim-wide ODE states; W_ode is block-diagonal.
        y = v3.reshape(rows, lane)

        w_mm = wode_ref[...]                         # (lane, lane), bf16 or f32
        bode = bode_ref[...]                         # (1, lane): single replicated vreg

        def f(yy):
            # synthetic odefunction: f(t, y) = tanh(y @ W_ode + b_ode), autonomous.
            return jnp.tanh(
                jnp.dot(yy.astype(w_mm.dtype), w_mm,
                        preferred_element_type=jnp.float32) + bode)

        def rk4_step(i, yy):
            dt = dt_ref[i]                           # SMEM scalar read (free slot)
            k1 = f(yy)
            k2 = f(yy + (0.5 * dt) * k1)
            k3 = f(yy + (0.5 * dt) * k2)
            k4 = f(yy + dt * k3)
            return yy + (dt / 6.0) * (k1 + 2.0 * (k2 + k3) + k4)

        if nsteps > 0:
            y = lax.fori_loop(0, nsteps, rk4_step, y, unroll=unroll)

        out_ref[...] = y.reshape(g_blk, dim_tile, lane).astype(out_ref.dtype)

    return kernel


def ode_integrator_forward(z, params, integration_times, use_bf16_matmul=True):
    """JAX/Pallas equivalent of ODEIntegrator.forward.

    z: (batch, 1, dim, dim, 2) -> input_bias branch (len(z.size()) > 4), or
       (batch, 1, dim, dim)    -> v = z branch.
    integration_times: concrete (non-traced) 1-D time grid.
    Returns (batch, 1, dim, dim) float32.
    # TODO(synk): torch.zeros(..., dtype=float) makes the reference accumulate in
    #   float64; TPU kernel accumulates in float32 (bf16 MXU operands by default).
    """
    z = z.astype(jnp.float32)
    apply_bias = z.ndim > 4

    if apply_bias:
        batch, _, dim, dim2, two = z.shape
        assert dim == dim2 and two == 2
        # (batch,1,dim,dim,2) -> (batch,2,dim,dim) already in (k, j) layout:
        #   zt[b, f, k, j] = z[b, 0, j, k, f]   (reference's (j,k)->(k,j) transpose)
        zt = jnp.transpose(z[:, 0], (0, 3, 2, 1))
    else:
        batch, _, dim, dim2 = z.shape
        assert dim == dim2
        zt = z[:, 0][:, None]                        # (batch, 1, dim, dim)
    n_feat = zt.shape[1]

    # ---- Lane packing: P batch items side-by-side along lanes --------------------
    P = max(1, 128 // dim)
    lane = P * dim
    num_groups = _cdiv(batch, P)
    g_blk, dim_tile = _choose_tiling(num_groups, dim, lane)
    num_gblocks = _cdiv(num_groups, g_blk)
    num_rblocks = _cdiv(dim, dim_tile)
    num_groups_p = num_gblocks * g_blk
    batch_p = num_groups_p * P

    if batch_p != batch:
        zt = jnp.pad(zt, ((0, batch_p - batch),) + ((0, 0),) * (zt.ndim - 1))

    # (batch_p, f, dim, dim) -> (G, f, dim, P*dim):  zk[g, f, k, p*dim + j]
    zk = zt.reshape(num_groups_p, P, n_feat, dim, dim)
    zk = jnp.transpose(zk, (0, 2, 3, 1, 4)).reshape(num_groups_p, n_feat, dim, lane)

    # ---- Parameters laid out once in the wrapper ---------------------------------
    w0p = jnp.tile(params["ib_w0"].T, (1, P))        # (dim, lane)
    w1p = jnp.tile(params["ib_w1"].T, (1, P))
    bbp = jnp.tile(params["ib_b"].T, (1, P))
    wode = params["ode_w"].astype(jnp.float32)
    w_bd = jnp.kron(jnp.eye(P, dtype=jnp.float32), wode)    # block-diag (lane, lane)
    w_mm = w_bd.astype(jnp.bfloat16) if use_bf16_matmul else w_bd
    bode_p = jnp.tile(params["ode_b"].astype(jnp.float32), (1, P))   # (1, lane)

    # ---- Per-step dt table (SMEM) -------------------------------------------------
    t = np.asarray(jax.device_get(integration_times), dtype=np.float64).reshape(-1)
    dts_np = np.diff(t).astype(np.float32)
    nsteps = int(dts_np.size)
    dts = jnp.asarray(dts_np if nsteps > 0 else np.zeros((1,), np.float32))

    unroll = True if nsteps <= 32 else 4
    kernel = _make_kernel(nsteps, apply_bias, g_blk, dim_tile, lane, unroll)

    # ---- VMEM budget (last dim padded to 128, sublanes to 8/16) ------------------
    lane_p = _pad_to(lane, 128)
    st = _pad_to(dim_tile, 8)
    w_item = 2 if use_bf16_matmul else 4
    w_sub = 16 if use_bf16_matmul else 8
    blk_in = g_blk * n_feat * st * lane_p * 4
    blk_maps = 3 * st * lane_p * 4
    blk_wode = _pad_to(lane, w_sub) * lane_p * w_item
    blk_bode = 8 * lane_p * 4
    blk_out = g_blk * st * lane_p * 4
    loop_live = 8 * g_blk * st * lane_p * 4
    vmem_limit = 2 * (blk_in + blk_maps + blk_wode + blk_bode + blk_out) + loop_live
    vmem_limit = int(min(max(vmem_limit + (2 << 20), 8 << 20), _vmem_cap_bytes()))

    out_packed = pl.pallas_call(
        kernel,
        out_shape=jax.ShapeDtypeStruct((num_groups_p, dim, lane), jnp.float32),
        grid_spec=pltpu.PrefetchScalarGridSpec(
            num_scalar_prefetch=0,
            grid=(num_gblocks, num_rblocks),
            in_specs=[
                pl.BlockSpec(memory_space=pltpu.MemorySpace.SMEM),              # dts
                pl.BlockSpec((g_blk, n_feat, dim_tile, lane),
                             lambda g, r: (g, 0, r, 0)),                        # z
                pl.BlockSpec((dim_tile, lane), lambda g, r: (r, 0)),            # w0
                pl.BlockSpec((dim_tile, lane), lambda g, r: (r, 0)),            # w1
                pl.BlockSpec((dim_tile, lane), lambda g, r: (r, 0)),            # bias
                pl.BlockSpec((lane, lane), lambda g, r: (0, 0)),                # W_ode
                pl.BlockSpec((1, lane), lambda g, r: (0, 0)),                   # b_ode
            ],
            out_specs=pl.BlockSpec((g_blk, dim_tile, lane),
                                   lambda g, r: (g, r, 0)),
        ),
        compiler_params=pltpu.CompilerParams(
            dimension_semantics=("parallel", "parallel"),
            vmem_limit_bytes=vmem_limit),
    )(dts, zk, w0p, w1p, bbp, w_mm, bode_p)

    # Unpack lanes -> (batch, 1, dim, dim); cheap XLA reshape/transpose outside kernel.
    out = out_packed.reshape(num_groups_p, dim, P, dim)
    out = jnp.transpose(out, (0, 2, 1, 3)).reshape(batch_p, dim, dim)[:batch]
    return out[:, None]


def init_params(dim, key):
    """Deterministic synthetic parameters (shapes implied by __init__)."""
    k0, k1, k2, k3, k4 = jax.random.split(key, 5)
    # input_bias[j][k] = nn.Linear(2, 1): weight (1,2) -> two (dim,dim) maps indexed
    # [j,k]; bias (1,) -> one (dim,dim) map indexed [j,k].
    ib_w0 = jax.random.normal(k0, (dim, dim), jnp.float32) * 0.5
    ib_w1 = jax.random.normal(k1, (dim, dim), jnp.float32) * 0.5
    ib_b = jax.random.normal(k2, (dim, dim), jnp.float32) * 0.1
    # synthetic odefunction parameters
    ode_w = jax.random.normal(k3, (dim, dim), jnp.float32) * (1.0 / (dim ** 0.5))
    ode_b = jax.random.normal(k4, (1, dim), jnp.float32) * 0.1
    return dict(ib_w0=ib_w0, ib_w1=ib_w1, ib_b=ib_b, ode_w=ode_w, ode_b=ode_b)


def _reference_forward(z, params, integration_times):
    """Pure-JAX reference (f32) for validation."""
    zt = jnp.transpose(z[:, 0], (0, 3, 2, 1))            # [b, f, k, j]
    v = (params["ib_w0"].T[None] * zt[:, 0]
         + params["ib_w1"].T[None] * zt[:, 1]
         + params["ib_b"].T[None])                       # (batch, dim, dim)
    w, b = params["ode_w"], params["ode_b"]

    def f(y):
        return jnp.tanh(jnp.matmul(y, w, precision=jax.lax.Precision.HIGHEST) + b)

    t = np.asarray(jax.device_get(integration_times), dtype=np.float64).reshape(-1)
    y = v
    for dt in np.diff(t):
        dt = float(dt)
        k1 = f(y)
        k2 = f(y + 0.5 * dt * k1)
        k3 = f(y + 0.5 * dt * k2)
        k4 = f(y + dt * k3)
        y = y + (dt / 6.0) * (k1 + 2.0 * (k2 + k3) + k4)
    return y[:, None]


if __name__ == "__main__":
    batch, dim = 4, 16
    key = jax.random.PRNGKey(0)
    kz, kp = jax.random.split(key)

    # PyTorch-layout input: (batch, 1, dim, dim, 2) -> triggers the input_bias branch
    z = jax.random.normal(kz, (batch, 1, dim, dim, 2), jnp.float32)
    params = init_params(dim, kp)

    integration_times = jnp.linspace(0.0, 1.0, 9)        # 8 RK4 steps, dt = 0.125

    out = ode_integrator_forward(z, params, integration_times)
    out = jax.block_until_ready(out)

    assert out.shape == (batch, 1, dim, dim)
    assert out.dtype == jnp.float32
    assert bool(jnp.all(jnp.isfinite(out)))

    # Validation: f32 kernel path tight vs pure-JAX reference; bf16 path loose.
    ref = jax.block_until_ready(_reference_forward(z, params, integration_times))
    out_f32 = jax.block_until_ready(
        ode_integrator_forward(z, params, integration_times, use_bf16_matmul=False))
    assert bool(jnp.allclose(out_f32, ref, atol=5e-3, rtol=5e-3))
    assert bool(jnp.allclose(out, ref, atol=5e-2, rtol=5e-2))

    print("KERNEL_OK")
</pallas_src>

<mosaic_0001>
module attributes {stable_mosaic.version = 11 : i64} {
  func.func @kernel(%arg0: i32, %arg1: i32, %arg2: memref<8xf32, #tpu.memory_space<smem>>, %arg3: memref<1x2x8x128xf32, #tpu.memory_space<vmem>>, %arg4: memref<8x128xf32, #tpu.memory_space<vmem>>, %arg5: memref<8x128xf32, #tpu.memory_space<vmem>>, %arg6: memref<8x128xf32, #tpu.memory_space<vmem>>, %arg7: memref<128x128xbf16, #tpu.memory_space<vmem>>, %arg8: memref<1x128xf32, #tpu.memory_space<vmem>>, %arg9: memref<1x8x128xf32, #tpu.memory_space<vmem>>) attributes {dimension_semantics = [#tpu.dimension_semantics<parallel>, #tpu.dimension_semantics<parallel>], iteration_bounds = array<i64: 1, 2>, scalar_prefetch = 0 : i64, scratch_operands = 0 : i64, tpu.core_type = #tpu.core_type<tc>, window_params = [{transform_indices = @transform_0, window_bounds = array<i64: 8>}, {transform_indices = @transform_1, window_bounds = array<i64: 1, 2, 8, 128>}, {transform_indices = @transform_2, window_bounds = array<i64: 8, 128>}, {transform_indices = @transform_3, window_bounds = array<i64: 8, 128>}, {transform_indices = @transform_4, window_bounds = array<i64: 8, 128>}, {pipeline_mode = #tpu.pipeline_mode<synchronous>, transform_indices = @transform_5, window_bounds = array<i64: 128, 128>}, {pipeline_mode = #tpu.pipeline_mode<synchronous>, transform_indices = @transform_6, window_bounds = array<i64: 1, 128>}, {transform_indices = @transform_7, window_bounds = array<i64: 1, 8, 128>}]} {
    %c0 = arith.constant 0 : index
    %c0_0 = arith.constant 0 : index
    %c0_1 = arith.constant 0 : index
    %c0_2 = arith.constant 0 : index
    %0 = vector.load %arg3[%c0, %c0_0, %c0_1, %c0_2] : memref<1x2x8x128xf32, #tpu.memory_space<vmem>>, vector<1x2x8x128xf32>
    %c0_3 = arith.constant 0 : index
    %c0_4 = arith.constant 0 : index
    %1 = vector.load %arg4[%c0_3, %c0_4] : memref<8x128xf32, #tpu.memory_space<vmem>>, vector<8x128xf32>
    %2 = vector.extract_strided_slice %0 {offsets = [0, 0, 0, 0], sizes = [1, 1, 8, 128], strides = [1, 1, 1, 1]} : vector<1x2x8x128xf32> to vector<1x1x8x128xf32>
    %3 = vector.shape_cast %2 : vector<1x1x8x128xf32> to vector<1x8x128xf32>
    %4 = vector.shape_cast %1 : vector<8x128xf32> to vector<1x8x128xf32>
    %5 = arith.mulf %4, %3 : vector<1x8x128xf32>
    %c0_5 = arith.constant 0 : index
    %c0_6 = arith.constant 0 : index
    %6 = vector.load %arg5[%c0_5, %c0_6] : memref<8x128xf32, #tpu.memory_space<vmem>>, vector<8x128xf32>
    %7 = vector.extract_strided_slice %0 {offsets = [0, 1, 0, 0], sizes = [1, 1, 8, 128], strides = [1, 1, 1, 1]} : vector<1x2x8x128xf32> to vector<1x1x8x128xf32>
    %8 = vector.shape_cast %7 : vector<1x1x8x128xf32> to vector<1x8x128xf32>
    %9 = vector.shape_cast %6 : vector<8x128xf32> to vector<1x8x128xf32>
    %10 = arith.mulf %9, %8 : vector<1x8x128xf32>
    %11 = arith.addf %5, %10 : vector<1x8x128xf32>
    %c0_7 = arith.constant 0 : index
    %c0_8 = arith.constant 0 : index
    %12 = vector.load %arg6[%c0_7, %c0_8] : memref<8x128xf32, #tpu.memory_space<vmem>>, vector<8x128xf32>
    %13 = vector.shape_cast %12 : vector<8x128xf32> to vector<1x8x128xf32>
    %14 = arith.addf %11, %13 : vector<1x8x128xf32>
    %15 = vector.shape_cast %14 : vector<1x8x128xf32> to vector<8x128xf32>
    %c0_9 = arith.constant 0 : index
    %c0_10 = arith.constant 0 : index
    %16 = vector.load %arg7[%c0_9, %c0_10] : memref<128x128xbf16, #tpu.memory_space<vmem>>, vector<128x128xbf16>
    %c0_11 = arith.constant 0 : index
    %c0_12 = arith.constant 0 : index
    %17 = vector.load %arg8[%c0_11, %c0_12] : memref<1x128xf32, #tpu.memory_space<vmem>>, vector<1x128xf32>
    %c0_i32 = arith.constant 0 : i32
    %18 = arith.index_cast %c0_i32 : i32 to index
    %19 = memref.load %arg2[%18] : memref<8xf32, #tpu.memory_space<smem>>
    %20 = arith.truncf %15 : vector<8x128xf32> to vector<8x128xbf16>
    %cst = arith.constant dense<0.000000e+00> : vector<8x128xf32>
    %21 = tpu.matmul %20, %16, %cst {dimension_numbers = #tpu.dot_dimension_numbers<[1], [0], [0], [1], [0, 0, 1, 1], [], []>} : vector<8x128xbf16>, vector<128x128xbf16>, vector<8x128xf32> -> vector<8x128xf32>
    %22 = vector.broadcast %17 : vector<1x128xf32> to vector<8x128xf32>
    %23 = arith.addf %21, %22 : vector<8x128xf32>
    %24 = math.tanh %23 : vector<8x128xf32>
    %cst_13 = arith.constant 5.000000e-01 : f32
    %25 = arith.mulf %cst_13, %19 : f32
    %26 = vector.broadcast %25 : f32 to vector<8x128xf32>
    %27 = arith.mulf %26, %24 : vector<8x128xf32>
    %28 = arith.addf %15, %27 : vector<8x128xf32>
    %29 = arith.truncf %28 : vector<8x128xf32> to vector<8x128xbf16>
    %cst_14 = arith.constant dense<0.000000e+00> : vector<8x128xf32>
    %30 = tpu.matmul %29, %16, %cst_14 {dimension_numbers = #tpu.dot_dimension_numbers<[1], [0], [0], [1], [0, 0, 1, 1], [], []>} : vector<8x128xbf16>, vector<128x128xbf16>, vector<8x128xf32> -> vector<8x128xf32>
    %31 = vector.broadcast %17 : vector<1x128xf32> to vector<8x128xf32>
    %32 = arith.addf %30, %31 : vector<8x128xf32>
    %33 = math.tanh %32 : vector<8x128xf32>
    %cst_15 = arith.constant 5.000000e-01 : f32
    %34 = arith.mulf %cst_15, %19 : f32
    %35 = vector.broadcast %34 : f32 to vector<8x128xf32>
    %36 = arith.mulf %35, %33 : vector<8x128xf32>
    %37 = arith.addf %15, %36 : vector<8x128xf32>
    %38 = arith.truncf %37 : vector<8x128xf32> to vector<8x128xbf16>
    %cst_16 = arith.constant dense<0.000000e+00> : vector<8x128xf32>
    %39 = tpu.matmul %38, %16, %cst_16 {dimension_numbers = #tpu.dot_dimension_numbers<[1], [0], [0], [1], [0, 0, 1, 1], [], []>} : vector<8x128xbf16>, vector<128x128xbf16>, vector<8x128xf32> -> vector<8x128xf32>
    %40 = vector.broadcast %17 : vector<1x128xf32> to vector<8x128xf32>
    %41 = arith.addf %39, %40 : vector<8x128xf32>
    %42 = math.tanh %41 : vector<8x128xf32>
    %43 = vector.broadcast %19 : f32 to vector<8x128xf32>
    %44 = arith.mulf %43, %42 : vector<8x128xf32>
    %45 = arith.addf %15, %44 : vector<8x128xf32>
    %46 = arith.truncf %45 : vector<8x128xf32> to vector<8x128xbf16>
    %cst_17 = arith.constant dense<0.000000e+00> : vector<8x128xf32>
    %47 = tpu.matmul %46, %16, %cst_17 {dimension_numbers = #tpu.dot_dimension_numbers<[1], [0], [0], [1], [0, 0, 1, 1], [], []>} : vector<8x128xbf16>, vector<128x128xbf16>, vector<8x128xf32> -> vector<8x128xf32>
    %48 = vector.broadcast %17 : vector<1x128xf32> to vector<8x128xf32>
    %49 = arith.addf %47, %48 : vector<8x128xf32>
    %50 = math.tanh %49 : vector<8x128xf32>
    %cst_18 = arith.constant 6.000000e+00 : f32
    %51 = arith.divf %19, %cst_18 : f32
    %52 = arith.addf %33, %42 : vector<8x128xf32>
    %cst_19 = arith.constant 2.000000e+00 : f32
    %53 = vector.broadcast %cst_19 : f32 to vector<8x128xf32>
    %54 = arith.mulf %53, %52 : vector<8x128xf32>
    %55 = arith.addf %24, %54 : vector<8x128xf32>
    %56 = arith.addf %55, %50 : vector<8x128xf32>
    %57 = vector.broadcast %51 : f32 to vector<8x128xf32>
    %58 = arith.mulf %57, %56 : vector<8x128xf32>
    %59 = arith.addf %15, %58 : vector<8x128xf32>
    %c1_i32 = arith.constant 1 : i32
    %60 = arith.index_cast %c1_i32 : i32 to index
    %61 = memref.load %arg2[%60] : memref<8xf32, #tpu.memory_space<smem>>
    %62 = arith.truncf %59 : vector<8x128xf32> to vector<8x128xbf16>
    %cst_20 = arith.constant dense<0.000000e+00> : vector<8x128xf32>
    %63 = tpu.matmul %62, %16, %cst_20 {dimension_numbers = #tpu.dot_dimension_numbers<[1], [0], [0], [1], [0, 0, 1, 1], [], []>} : vector<8x128xbf16>, vector<128x128xbf16>, vector<8x128xf32> -> vector<8x128xf32>
    %64 = vector.broadcast %17 : vector<1x128xf32> to vector<8x128xf32>
    %65 = arith.addf %63, %64 : vector<8x128xf32>
    %66 = math.tanh %65 : vector<8x128xf32>
    %cst_21 = arith.constant 5.000000e-01 : f32
    %67 = arith.mulf %cst_21, %61 : f32
    %68 = vector.broadcast %67 : f32 to vector<8x128xf32>
    %69 = arith.mulf %68, %66 : vector<8x128xf32>
    %70 = arith.addf %59, %69 : vector<8x128xf32>
    %71 = arith.truncf %70 : vector<8x128xf32> to vector<8x128xbf16>
    %cst_22 = arith.constant dense<0.000000e+00> : vector<8x128xf32>
    %72 = tpu.matmul %71, %16, %cst_22 {dimension_numbers = #tpu.dot_dimension_numbers<[1], [0], [0], [1], [0, 0, 1, 1], [], []>} : vector<8x128xbf16>, vector<128x128xbf16>, vector<8x128xf32> -> vector<8x128xf32>
    %73 = vector.broadcast %17 : vector<1x128xf32> to vector<8x128xf32>
    %74 = arith.addf %72, %73 : vector<8x128xf32>
    %75 = math.tanh %74 : vector<8x128xf32>
    %cst_23 = arith.constant 5.000000e-01 : f32
    %76 = arith.mulf %cst_23, %61 : f32
    %77 = vector.broadcast %76 : f32 to vector<8x128xf32>
    %78 = arith.mulf %77, %75 : vector<8x128xf32>
    %79 = arith.addf %59, %78 : vector<8x128xf32>
    %80 = arith.truncf %79 : vector<8x128xf32> to vector<8x128xbf16>
    %cst_24 = arith.constant dense<0.000000e+00> : vector<8x128xf32>
    %81 = tpu.matmul %80, %16, %cst_24 {dimension_numbers = #tpu.dot_dimension_numbers<[1], [0], [0], [1], [0, 0, 1, 1], [], []>} : vector<8x128xbf16>, vector<128x128xbf16>, vector<8x128xf32> -> vector<8x128xf32>
    %82 = vector.broadcast %17 : vector<1x128xf32> to vector<8x128xf32>
    %83 = arith.addf %81, %82 : vector<8x128xf32>
    %84 = math.tanh %83 : vector<8x128xf32>
    %85 = vector.broadcast %61 : f32 to vector<8x128xf32>
    %86 = arith.mulf %85, %84 : vector<8x128xf32>
    %87 = arith.addf %59, %86 : vector<8x128xf32>
    %88 = arith.truncf %87 : vector<8x128xf32> to vector<8x128xbf16>
    %cst_25 = arith.constant dense<0.000000e+00> : vector<8x128xf32>
    %89 = tpu.matmul %88, %16, %cst_25 {dimension_numbers = #tpu.dot_dimension_numbers<[1], [0], [0], [1], [0, 0, 1, 1], [], []>} : vector<8x128xbf16>, vector<128x128xbf16>, vector<8x128xf32> -> vector<8x128xf32>
    %90 = vector.broadcast %17 : vector<1x128xf32> to vector<8x128xf32>
    %91 = arith.addf %89, %90 : vector<8x128xf32>
    %92 = math.tanh %91 : vector<8x128xf32>
    %cst_26 = arith.constant 6.000000e+00 : f32
    %93 = arith.divf %61, %cst_26 : f32
    %94 = arith.addf %75, %84 : vector<8x128xf32>
    %cst_27 = arith.constant 2.000000e+00 : f32
    %95 = vector.broadcast %cst_27 : f32 to vector<8x128xf32>
    %96 = arith.mulf %95, %94 : vector<8x128xf32>
    %97 = arith.addf %66, %96 : vector<8x128xf32>
    %98 = arith.addf %97, %92 : vector<8x128xf32>
    %99 = vector.broadcast %93 : f32 to vector<8x128xf32>
    %100 = arith.mulf %99, %98 : vector<8x128xf32>
    %101 = arith.addf %59, %100 : vector<8x128xf32>
    %c2_i32 = arith.constant 2 : i32
    %102 = arith.index_cast %c2_i32 : i32 to index
    %103 = memref.load %arg2[%102] : memref<8xf32, #tpu.memory_space<smem>>
    %104 = arith.truncf %101 : vector<8x128xf32> to vector<8x128xbf16>
    %cst_28 = arith.constant dense<0.000000e+00> : vector<8x128xf32>
    %105 = tpu.matmul %104, %16, %cst_28 {dimension_numbers = #tpu.dot_dimension_numbers<[1], [0], [0], [1], [0, 0, 1, 1], [], []>} : vector<8x128xbf16>, vector<128x128xbf16>, vector<8x128xf32> -> vector<8x128xf32>
    %106 = vector.broadcast %17 : vector<1x128xf32> to vector<8x128xf32>
    %107 = arith.addf %105, %106 : vector<8x128xf32>
    %108 = math.tanh %107 : vector<8x128xf32>
    %cst_29 = arith.constant 5.000000e-01 : f32
    %109 = arith.mulf %cst_29, %103 : f32
    %110 = vector.broadcast %109 : f32 to vector<8x128xf32>
    %111 = arith.mulf %110, %108 : vector<8x128xf32>
    %112 = arith.addf %101, %111 : vector<8x128xf32>
    %113 = arith.truncf %112 : vector<8x128xf32> to vector<8x128xbf16>
    %cst_30 = arith.constant dense<0.000000e+00> : vector<8x128xf32>
    %114 = tpu.matmul %113, %16, %cst_30 {dimension_numbers = #tpu.dot_dimension_numbers<[1], [0], [0], [1], [0, 0, 1, 1], [], []>} : vector<8x128xbf16>, vector<128x128xbf16>, vector<8x128xf32> -> vector<8x128xf32>
    %115 = vector.broadcast %17 : vector<1x128xf32> to vector<8x128xf32>
    %116 = arith.addf %114, %115 : vector<8x128xf32>
    %117 = math.tanh %116 : vector<8x128xf32>
    %cst_31 = arith.constant 5.000000e-01 : f32
    %118 = arith.mulf %cst_31, %103 : f32
    %119 = vector.broadcast %118 : f32 to vector<8x128xf32>
    %120 = arith.mulf %119, %117 : vector<8x128xf32>
    %121 = arith.addf %101, %120 : vector<8x128xf32>
    %122 = arith.truncf %121 : vector<8x128xf32> to vector<8x128xbf16>
    %cst_32 = arith.constant dense<0.000000e+00> : vector<8x128xf32>
    %123 = tpu.matmul %122, %16, %cst_32 {dimension_numbers = #tpu.dot_dimension_numbers<[1], [0], [0], [1], [0, 0, 1, 1], [], []>} : vector<8x128xbf16>, vector<128x128xbf16>, vector<8x128xf32> -> vector<8x128xf32>
    %124 = vector.broadcast %17 : vector<1x128xf32> to vector<8x128xf32>
    %125 = arith.addf %123, %124 : vector<8x128xf32>
    %126 = math.tanh %125 : vector<8x128xf32>
    %127 = vector.broadcast %103 : f32 to vector<8x128xf32>
    %128 = arith.mulf %127, %126 : vector<8x128xf32>
    %129 = arith.addf %101, %128 : vector<8x128xf32>
    %130 = arith.truncf %129 : vector<8x128xf32> to vector<8x128xbf16>
    %cst_33 = arith.constant dense<0.000000e+00> : vector<8x128xf32>
    %131 = tpu.matmul %130, %16, %cst_33 {dimension_numbers = #tpu.dot_dimension_numbers<[1], [0], [0], [1], [0, 0, 1, 1], [], []>} : vector<8x128xbf16>, vector<128x128xbf16>, vector<8x128xf32> -> vector<8x128xf32>
    %132 = vector.broadcast %17 : vector<1x128xf32> to vector<8x128xf32>
    %133 = arith.addf %131, %132 : vector<8x128xf32>
    %134 = math.tanh %133 : vector<8x128xf32>
    %cst_34 = arith.constant 6.000000e+00 : f32
    %135 = arith.divf %103, %cst_34 : f32
    %136 = arith.addf %117, %126 : vector<8x128xf32>
    %cst_35 = arith.constant 2.000000e+00 : f32
    %137 = vector.broadcast %cst_35 : f32 to vector<8x128xf32>
    %138 = arith.mulf %137, %136 : vector<8x128xf32>
    %139 = arith.addf %108, %138 : vector<8x128xf32>
    %140 = arith.addf %139, %134 : vector<8x128xf32>
    %141 = vector.broadcast %135 : f32 to vector<8x128xf32>
    %142 = arith.mulf %141, %140 : vector<8x128xf32>
    %143 = arith.addf %101, %142 : vector<8x128xf32>
    %c3_i32 = arith.constant 3 : i32
    %144 = arith.index_cast %c3_i32 : i32 to index
    %145 = memref.load %arg2[%144] : memref<8xf32, #tpu.memory_space<smem>>
    %146 = arith.truncf %143 : vector<8x128xf32> to vector<8x128xbf16>
    %cst_36 = arith.constant dense<0.000000e+00> : vector<8x128xf32>
    %147 = tpu.matmul %146, %16, %cst_36 {dimension_numbers = #tpu.dot_dimension_numbers<[1], [0], [0], [1], [0, 0, 1, 1], [], []>} : vector<8x128xbf16>, vector<128x128xbf16>, vector<8x128xf32> -> vector<8x128xf32>
    %148 = vector.broadcast %17 : vector<1x128xf32> to vector<8x128xf32>
    %149 = arith.addf %147, %148 : vector<8x128xf32>
    %150 = math.tanh %149 : vector<8x128xf32>
    %cst_37 = arith.constant 5.000000e-01 : f32
    %151 = arith.mulf %cst_37, %145 : f32
    %152 = vector.broadcast %151 : f32 to vector<8x128xf32>
    %153 = arith.mulf %152, %150 : vector<8x128xf32>
    %154 = arith.addf %143, %153 : vector<8x128xf32>
    %155 = arith.truncf %154 : vector<8x128xf32> to vector<8x128xbf16>
    %cst_38 = arith.constant dense<0.000000e+00> : vector<8x128xf32>
    %156 = tpu.matmul %155, %16, %cst_38 {dimension_numbers = #tpu.dot_dimension_numbers<[1], [0], [0], [1], [0, 0, 1, 1], [], []>} : vector<8x128xbf16>, vector<128x128xbf16>, vector<8x128xf32> -> vector<8x128xf32>
    %157 = vector.broadcast %17 : vector<1x128xf32> to vector<8x128xf32>
    %158 = arith.addf %156, %157 : vector<8x128xf32>
    %159 = math.tanh %158 : vector<8x128xf32>
    %cst_39 = arith.constant 5.000000e-01 : f32
    %160 = arith.mulf %cst_39, %145 : f32
    %161 = vector.broadcast %160 : f32 to vector<8x128xf32>
    %162 = arith.mulf %161, %159 : vector<8x128xf32>
    %163 = arith.addf %143, %162 : vector<8x128xf32>
    %164 = arith.truncf %163 : vector<8x128xf32> to vector<8x128xbf16>
    %cst_40 = arith.constant dense<0.000000e+00> : vector<8x128xf32>
    %165 = tpu.matmul %164, %16, %cst_40 {dimension_numbers = #tpu.dot_dimension_numbers<[1], [0], [0], [1], [0, 0, 1, 1], [], []>} : vector<8x128xbf16>, vector<128x128xbf16>, vector<8x128xf32> -> vector<8x128xf32>
    %166 = vector.broadcast %17 : vector<1x128xf32> to vector<8x128xf32>
    %167 = arith.addf %165, %166 : vector<8x128xf32>
    %168 = math.tanh %167 : vector<8x128xf32>
    %169 = vector.broadcast %145 : f32 to vector<8x128xf32>
    %170 = arith.mulf %169, %168 : vector<8x128xf32>
    %171 = arith.addf %143, %170 : vector<8x128xf32>
    %172 = arith.truncf %171 : vector<8x128xf32> to vector<8x128xbf16>
    %cst_41 = arith.constant dense<0.000000e+00> : vector<8x128xf32>
    %173 = tpu.matmul %172, %16, %cst_41 {dimension_numbers = #tpu.dot_dimension_numbers<[1], [0], [0], [1], [0, 0, 1, 1], [], []>} : vector<8x128xbf16>, vector<128x128xbf16>, vector<8x128xf32> -> vector<8x128xf32>
    %174 = vector.broadcast %17 : vector<1x128xf32> to vector<8x128xf32>
    %175 = arith.addf %173, %174 : vector<8x128xf32>
    %176 = math.tanh %175 : vector<8x128xf32>
    %cst_42 = arith.constant 6.000000e+00 : f32
    %177 = arith.divf %145, %cst_42 : f32
    %178 = arith.addf %159, %168 : vector<8x128xf32>
    %cst_43 = arith.constant 2.000000e+00 : f32
    %179 = vector.broadcast %cst_43 : f32 to vector<8x128xf32>
    %180 = arith.mulf %179, %178 : vector<8x128xf32>
    %181 = arith.addf %150, %180 : vector<8x128xf32>
    %182 = arith.addf %181, %176 : vector<8x128xf32>
    %183 = vector.broadcast %177 : f32 to vector<8x128xf32>
    %184 = arith.mulf %183, %182 : vector<8x128xf32>
    %185 = arith.addf %143, %184 : vector<8x128xf32>
    %c4_i32 = arith.constant 4 : i32
    %186 = arith.index_cast %c4_i32 : i32 to index
    %187 = memref.load %arg2[%186] : memref<8xf32, #tpu.memory_space<smem>>
    %188 = arith.truncf %185 : vector<8x128xf32> to vector<8x128xbf16>
    %cst_44 = arith.constant dense<0.000000e+00> : vector<8x128xf32>
    %189 = tpu.matmul %188, %16, %cst_44 {dimension_numbers = #tpu.dot_dimension_numbers<[1], [0], [0], [1], [0, 0, 1, 1], [], []>} : vector<8x128xbf16>, vector<128x128xbf16>, vector<8x128xf32> -> vector<8x128xf32>
    %190 = vector.broadcast %17 : vector<1x128xf32> to vector<8x128xf32>
    %191 = arith.addf %189, %190 : vector<8x128xf32>
    %192 = math.tanh %191 : vector<8x128xf32>
    %cst_45 = arith.constant 5.000000e-01 : f32
    %193 = arith.mulf %cst_45, %187 : f32
    %194 = vector.broadcast %193 : f32 to vector<8x128xf32>
    %195 = arith.mulf %194, %192 : vector<8x128xf32>
    %196 = arith.addf %185, %195 : vector<8x128xf32>
    %197 = arith.truncf %196 : vector<8x128xf32> to vector<8x128xbf16>
    %cst_46 = arith.constant dense<0.000000e+00> : vector<8x128xf32>
    %198 = tpu.matmul %197, %16, %cst_46 {dimension_numbers = #tpu.dot_dimension_numbers<[1], [0], [0], [1], [0, 0, 1, 1], [], []>} : vector<8x128xbf16>, vector<128x128xbf16>, vector<8x128xf32> -> vector<8x128xf32>
    %199 = vector.broadcast %17 : vector<1x128xf32> to vector<8x128xf32>
    %200 = arith.addf %198, %199 : vector<8x128xf32>
    %201 = math.tanh %200 : vector<8x128xf32>
    %cst_47 = arith.constant 5.000000e-01 : f32
    %202 = arith.mulf %cst_47, %187 : f32
    %203 = vector.broadcast %202 : f32 to vector<8x128xf32>
    %204 = arith.mulf %203, %201 : vector<8x128xf32>
    %205 = arith.addf %185, %204 : vector<8x128xf32>
    %206 = arith.truncf %205 : vector<8x128xf32> to vector<8x128xbf16>
    %cst_48 = arith.constant dense<0.000000e+00> : vector<8x128xf32>
    %207 = tpu.matmul %206, %16, %cst_48 {dimension_numbers = #tpu.dot_dimension_numbers<[1], [0], [0], [1], [0, 0, 1, 1], [], []>} : vector<8x128xbf16>, vector<128x128xbf16>, vector<8x128xf32> -> vector<8x128xf32>
    %208 = vector.broadcast %17 : vector<1x128xf32> to vector<8x128xf32>
    %209 = arith.addf %207, %208 : vector<8x128xf32>
    %210 = math.tanh %209 : vector<8x128xf32>
    %211 = vector.broadcast %187 : f32 to vector<8x128xf32>
    %212 = arith.mulf %211, %210 : vector<8x128xf32>
    %213 = arith.addf %185, %212 : vector<8x128xf32>
    %214 = arith.truncf %213 : vector<8x128xf32> to vector<8x128xbf16>
    %cst_49 = arith.constant dense<0.000000e+00> : vector<8x128xf32>
    %215 = tpu.matmul %214, %16, %cst_49 {dimension_numbers = #tpu.dot_dimension_numbers<[1], [0], [0], [1], [0, 0, 1, 1], [], []>} : vector<8x128xbf16>, vector<128x128xbf16>, vector<8x128xf32> -> vector<8x128xf32>
    %216 = vector.broadcast %17 : vector<1x128xf32> to vector<8x128xf32>
    %217 = arith.addf %215, %216 : vector<8x128xf32>
    %218 = math.tanh %217 : vector<8x128xf32>
    %cst_50 = arith.constant 6.000000e+00 : f32
    %219 = arith.divf %187, %cst_50 : f32
    %220 = arith.addf %201, %210 : vector<8x128xf32>
    %cst_51 = arith.constant 2.000000e+00 : f32
    %221 = vector.broadcast %cst_51 : f32 to vector<8x128xf32>
    %222 = arith.mulf %221, %220 : vector<8x128xf32>
    %223 = arith.addf %192, %222 : vector<8x128xf32>
    %224 = arith.addf %223, %218 : vector<8x128xf32>
    %225 = vector.broadcast %219 : f32 to vector<8x128xf32>
    %226 = arith.mulf %225, %224 : vector<8x128xf32>
    %227 = arith.addf %185, %226 : vector<8x128xf32>
    %c5_i32 = arith.constant 5 : i32
    %228 = arith.index_cast %c5_i32 : i32 to index
    %229 = memref.load %arg2[%228] : memref<8xf32, #tpu.memory_space<smem>>
    %230 = arith.truncf %227 : vector<8x128xf32> to vector<8x128xbf16>
    %cst_52 = arith.constant dense<0.000000e+00> : vector<8x128xf32>
    %231 = tpu.matmul %230, %16, %cst_52 {dimension_numbers = #tpu.dot_dimension_numbers<[1], [0], [0], [1], [0, 0, 1, 1], [], []>} : vector<8x128xbf16>, vector<128x128xbf16>, vector<8x128xf32> -> vector<8x128xf32>
    %232 = vector.broadcast %17 : vector<1x128xf32> to vector<8x128xf32>
    %233 = arith.addf %231, %232 : vector<8x128xf32>
    %234 = math.tanh %233 : vector<8x128xf32>
    %cst_53 = arith.constant 5.000000e-01 : f32
    %235 = arith.mulf %cst_53, %229 : f32
    %236 = vector.broadcast %235 : f32 to vector<8x128xf32>
    %237 = arith.mulf %236, %234 : vector<8x128xf32>
    %238 = arith.addf %227, %237 : vector<8x128xf32>
    %239 = arith.truncf %238 : vector<8x128xf32> to vector<8x128xbf16>
    %cst_54 = arith.constant dense<0.000000e+00> : vector<8x128xf32>
    %240 = tpu.matmul %239, %16, %cst_54 {dimension_numbers = #tpu.dot_dimension_numbers<[1], [0], [0], [1], [0, 0, 1, 1], [], []>} : vector<8x128xbf16>, vector<128x128xbf16>, vector<8x128xf32> -> vector<8x128xf32>
    %241 = vector.broadcast %17 : vector<1x128xf32> to vector<8x128xf32>
    %242 = arith.addf %240, %241 : vector<8x128xf32>
    %243 = math.tanh %242 : vector<8x128xf32>
    %cst_55 = arith.constant 5.000000e-01 : f32
    %244 = arith.mulf %cst_55, %229 : f32
    %245 = vector.broadcast %244 : f32 to vector<8x128xf32>
    %246 = arith.mulf %245, %243 : vector<8x128xf32>
    %247 = arith.addf %227, %246 : vector<8x128xf32>
    %248 = arith.truncf %247 : vector<8x128xf32> to vector<8x128xbf16>
    %cst_56 = arith.constant dense<0.000000e+00> : vector<8x128xf32>
    %249 = tpu.matmul %248, %16, %cst_56 {dimension_numbers = #tpu.dot_dimension_numbers<[1], [0], [0], [1], [0, 0, 1, 1], [], []>} : vector<8x128xbf16>, vector<128x128xbf16>, vector<8x128xf32> -> vector<8x128xf32>
    %250 = vector.broadcast %17 : vector<1x128xf32> to vector<8x128xf32>
    %251 = arith.addf %249, %250 : vector<8x128xf32>
    %252 = math.tanh %251 : vector<8x128xf32>
    %253 = vector.broadcast %229 : f32 to vector<8x128xf32>
    %254 = arith.mulf %253, %252 : vector<8x128xf32>
    %255 = arith.addf %227, %254 : vector<8x128xf32>
    %256 = arith.truncf %255 : vector<8x128xf32> to vector<8x128xbf16>
    %cst_57 = arith.constant dense<0.000000e+00> : vector<8x128xf32>
    %257 = tpu.matmul %256, %16, %cst_57 {dimension_numbers = #tpu.dot_dimension_numbers<[1], [0], [0], [1], [0, 0, 1, 1], [], []>} : vector<8x128xbf16>, vector<128x128xbf16>, vector<8x128xf32> -> vector<8x128xf32>
    %258 = vector.broadcast %17 : vector<1x128xf32> to vector<8x128xf32>
    %259 = arith.addf %257, %258 : vector<8x128xf32>
    %260 = math.tanh %259 : vector<8x128xf32>
    %cst_58 = arith.constant 6.000000e+00 : f32
    %261 = arith.divf %229, %cst_58 : f32
    %262 = arith.addf %243, %252 : vector<8x128xf32>
    %cst_59 = arith.constant 2.000000e+00 : f32
    %263 = vector.broadcast %cst_59 : f32 to vector<8x128xf32>
    %264 = arith.mulf %263, %262 : vector<8x128xf32>
    %265 = arith.addf %234, %264 : vector<8x128xf32>
    %266 = arith.addf %265, %260 : vector<8x128xf32>
    %267 = vector.broadcast %261 : f32 to vector<8x128xf32>
    %268 = arith.mulf %267, %266 : vector<8x128xf32>
    %269 = arith.addf %227, %268 : vector<8x128xf32>
    %c6_i32 = arith.constant 6 : i32
    %270 = arith.index_cast %c6_i32 : i32 to index
    %271 = memref.load %arg2[%270] : memref<8xf32, #tpu.memory_space<smem>>
    %272 = arith.truncf %269 : vector<8x128xf32> to vector<8x128xbf16>
    %cst_60 = arith.constant dense<0.000000e+00> : vector<8x128xf32>
    %273 = tpu.matmul %272, %16, %cst_60 {dimension_numbers = #tpu.dot_dimension_numbers<[1], [0], [0], [1], [0, 0, 1, 1], [], []>} : vector<8x128xbf16>, vector<128x128xbf16>, vector<8x128xf32> -> vector<8x128xf32>
    %274 = vector.broadcast %17 : vector<1x128xf32> to vector<8x128xf32>
    %275 = arith.addf %273, %274 : vector<8x128xf32>
    %276 = math.tanh %275 : vector<8x128xf32>
    %cst_61 = arith.constant 5.000000e-01 : f32
    %277 = arith.mulf %cst_61, %271 : f32
    %278 = vector.broadcast %277 : f32 to vector<8x128xf32>
    %279 = arith.mulf %278, %276 : vector<8x128xf32>
    %280 = arith.addf %269, %279 : vector<8x128xf32>
    %281 = arith.truncf %280 : vector<8x128xf32> to vector<8x128xbf16>
    %cst_62 = arith.constant dense<0.000000e+00> : vector<8x128xf32>
    %282 = tpu.matmul %281, %16, %cst_62 {dimension_numbers = #tpu.dot_dimension_numbers<[1], [0], [0], [1], [0, 0, 1, 1], [], []>} : vector<8x128xbf16>, vector<128x128xbf16>, vector<8x128xf32> -> vector<8x128xf32>
    %283 = vector.broadcast %17 : vector<1x128xf32> to vector<8x128xf32>
    %284 = arith.addf %282, %283 : vector<8x128xf32>
    %285 = math.tanh %284 : vector<8x128xf32>
    %cst_63 = arith.constant 5.000000e-01 : f32
    %286 = arith.mulf %cst_63, %271 : f32
    %287 = vector.broadcast %286 : f32 to vector<8x128xf32>
    %288 = arith.mulf %287, %285 : vector<8x128xf32>
    %289 = arith.addf %269, %288 : vector<8x128xf32>
    %290 = arith.truncf %289 : vector<8x128xf32> to vector<8x128xbf16>
    %cst_64 = arith.constant dense<0.000000e+00> : vector<8x128xf32>
    %291 = tpu.matmul %290, %16, %cst_64 {dimension_numbers = #tpu.dot_dimension_numbers<[1], [0], [0], [1], [0, 0, 1, 1], [], []>} : vector<8x128xbf16>, vector<128x128xbf16>, vector<8x128xf32> -> vector<8x128xf32>
    %292 = vector.broadcast %17 : vector<1x128xf32> to vector<8x128xf32>
    %293 = arith.addf %291, %292 : vector<8x128xf32>
    %294 = math.tanh %293 : vector<8x128xf32>
    %295 = vector.broadcast %271 : f32 to vector<8x128xf32>
    %296 = arith.mulf %295, %294 : vector<8x128xf32>
    %297 = arith.addf %269, %296 : vector<8x128xf32>
    %298 = arith.truncf %297 : vector<8x128xf32> to vector<8x128xbf16>
    %cst_65 = arith.constant dense<0.000000e+00> : vector<8x128xf32>
    %299 = tpu.matmul %298, %16, %cst_65 {dimension_numbers = #tpu.dot_dimension_numbers<[1], [0], [0], [1], [0, 0, 1, 1], [], []>} : vector<8x128xbf16>, vector<128x128xbf16>, vector<8x128xf32> -> vector<8x128xf32>
    %300 = vector.broadcast %17 : vector<1x128xf32> to vector<8x128xf32>
    %301 = arith.addf %299, %300 : vector<8x128xf32>
    %302 = math.tanh %301 : vector<8x128xf32>
    %cst_66 = arith.constant 6.000000e+00 : f32
    %303 = arith.divf %271, %cst_66 : f32
    %304 = arith.addf %285, %294 : vector<8x128xf32>
    %cst_67 = arith.constant 2.000000e+00 : f32
    %305 = vector.broadcast %cst_67 : f32 to vector<8x128xf32>
    %306 = arith.mulf %305, %304 : vector<8x128xf32>
    %307 = arith.addf %276, %306 : vector<8x128xf32>
    %308 = arith.addf %307, %302 : vector<8x128xf32>
    %309 = vector.broadcast %303 : f32 to vector<8x128xf32>
    %310 = arith.mulf %309, %308 : vector<8x128xf32>
    %311 = arith.addf %269, %310 : vector<8x128xf32>
    %c7_i32 = arith.constant 7 : i32
    %312 = arith.index_cast %c7_i32 : i32 to index
    %313 = memref.load %arg2[%312] : memref<8xf32, #tpu.memory_space<smem>>
    %314 = arith.truncf %311 : vector<8x128xf32> to vector<8x128xbf16>
    %cst_68 = arith.constant dense<0.000000e+00> : vector<8x128xf32>
    %315 = tpu.matmul %314, %16, %cst_68 {dimension_numbers = #tpu.dot_dimension_numbers<[1], [0], [0], [1], [0, 0, 1, 1], [], []>} : vector<8x128xbf16>, vector<128x128xbf16>, vector<8x128xf32> -> vector<8x128xf32>
    %316 = vector.broadcast %17 : vector<1x128xf32> to vector<8x128xf32>
    %317 = arith.addf %315, %316 : vector<8x128xf32>
    %318 = math.tanh %317 : vector<8x128xf32>
    %cst_69 = arith.constant 5.000000e-01 : f32
    %319 = arith.mulf %cst_69, %313 : f32
    %320 = vector.broadcast %319 : f32 to vector<8x128xf32>
    %321 = arith.mulf %320, %318 : vector<8x128xf32>
    %322 = arith.addf %311, %321 : vector<8x128xf32>
    %323 = arith.truncf %322 : vector<8x128xf32> to vector<8x128xbf16>
    %cst_70 = arith.constant dense<0.000000e+00> : vector<8x128xf32>
    %324 = tpu.matmul %323, %16, %cst_70 {dimension_numbers = #tpu.dot_dimension_numbers<[1], [0], [0], [1], [0, 0, 1, 1], [], []>} : vector<8x128xbf16>, vector<128x128xbf16>, vector<8x128xf32> -> vector<8x128xf32>
    %325 = vector.broadcast %17 : vector<1x128xf32> to vector<8x128xf32>
    %326 = arith.addf %324, %325 : vector<8x128xf32>
    %327 = math.tanh %326 : vector<8x128xf32>
    %cst_71 = arith.constant 5.000000e-01 : f32
    %328 = arith.mulf %cst_71, %313 : f32
    %329 = vector.broadcast %328 : f32 to vector<8x128xf32>
    %330 = arith.mulf %329, %327 : vector<8x128xf32>
    %331 = arith.addf %311, %330 : vector<8x128xf32>
    %332 = arith.truncf %331 : vector<8x128xf32> to vector<8x128xbf16>
    %cst_72 = arith.constant dense<0.000000e+00> : vector<8x128xf32>
    %333 = tpu.matmul %332, %16, %cst_72 {dimension_numbers = #tpu.dot_dimension_numbers<[1], [0], [0], [1], [0, 0, 1, 1], [], []>} : vector<8x128xbf16>, vector<128x128xbf16>, vector<8x128xf32> -> vector<8x128xf32>
    %334 = vector.broadcast %17 : vector<1x128xf32> to vector<8x128xf32>
    %335 = arith.addf %333, %334 : vector<8x128xf32>
    %336 = math.tanh %335 : vector<8x128xf32>
    %337 = vector.broadcast %313 : f32 to vector<8x128xf32>
    %338 = arith.mulf %337, %336 : vector<8x128xf32>
    %339 = arith.addf %311, %338 : vector<8x128xf32>
    %340 = arith.truncf %339 : vector<8x128xf32> to vector<8x128xbf16>
    %cst_73 = arith.constant dense<0.000000e+00> : vector<8x128xf32>
    %341 = tpu.matmul %340, %16, %cst_73 {dimension_numbers = #tpu.dot_dimension_numbers<[1], [0], [0], [1], [0, 0, 1, 1], [], []>} : vector<8x128xbf16>, vector<128x128xbf16>, vector<8x128xf32> -> vector<8x128xf32>
    %342 = vector.broadcast %17 : vector<1x128xf32> to vector<8x128xf32>
    %343 = arith.addf %341, %342 : vector<8x128xf32>
    %344 = math.tanh %343 : vector<8x128xf32>
    %cst_74 = arith.constant 6.000000e+00 : f32
    %345 = arith.divf %313, %cst_74 : f32
    %346 = arith.addf %327, %336 : vector<8x128xf32>
    %cst_75 = arith.constant 2.000000e+00 : f32
    %347 = vector.broadcast %cst_75 : f32 to vector<8x128xf32>
    %348 = arith.mulf %347, %346 : vector<8x128xf32>
    %349 = arith.addf %318, %348 : vector<8x128xf32>
    %350 = arith.addf %349, %344 : vector<8x128xf32>
    %351 = vector.broadcast %345 : f32 to vector<8x128xf32>
    %352 = arith.mulf %351, %350 : vector<8x128xf32>
    %353 = arith.addf %311, %352 : vector<8x128xf32>
    %c8_i32 = arith.constant 8 : i32
    %354 = vector.shape_cast %353 : vector<8x128xf32> to vector<1x8x128xf32>
    %c0_76 = arith.constant 0 : index
    %c0_77 = arith.constant 0 : index
    %c0_78 = arith.constant 0 : index
    %355 = vector.load %arg9[%c0_76, %c0_77, %c0_78] : memref<1x8x128xf32, #tpu.memory_space<vmem>>, vector<1x8x128xf32>
    tpu.vector_store %arg9[%c0_76, %c0_77, %c0_78], %354 {strides = array<i32>} : memref<1x8x128xf32, #tpu.memory_space<vmem>>, vector<1x8x128xf32>,
    return
  }
  func.func @transform_0(%arg0: i32, %arg1: i32) -> i32 {
    %c0_i32 = arith.constant 0 : i32
    %c0_i32_0 = arith.constant 0 : i32
    return %c0_i32 : i32
  }
  func.func @transform_1(%arg0: i32, %arg1: i32) -> (i32, i32, i32, i32) {
    %c0_i32 = arith.constant 0 : i32
    %c0_i32_0 = arith.constant 0 : i32
    %c0_i32_1 = arith.constant 0 : i32
    return %arg0, %c0_i32, %arg1, %c0_i32_0 : i32, i32, i32, i32
  }
  func.func @transform_2(%arg0: i32, %arg1: i32) -> (i32, i32) {
    %c0_i32 = arith.constant 0 : i32
    %c0_i32_0 = arith.constant 0 : i32
    return %arg1, %c0_i32 : i32, i32
  }
  func.func @transform_3(%arg0: i32, %arg1: i32) -> (i32, i32) {
    %c0_i32 = arith.constant 0 : i32
    %c0_i32_0 = arith.constant 0 : i32
    return %arg1, %c0_i32 : i32, i32
  }
  func.func @transform_4(%arg0: i32, %arg1: i32) -> (i32, i32) {
    %c0_i32 = arith.constant 0 : i32
    %c0_i32_0 = arith.constant 0 : i32
    return %arg1, %c0_i32 : i32, i32
  }
  func.func @transform_5(%arg0: i32, %arg1: i32) -> (i32, i32) {
    %c0_i32 = arith.constant 0 : i32
    %c0_i32_0 = arith.constant 0 : i32
    %c0_i32_1 = arith.constant 0 : i32
    return %c0_i32, %c0_i32_0 : i32, i32
  }
  func.func @transform_6(%arg0: i32, %arg1: i32) -> (i32, i32) {
    %c0_i32 = arith.constant 0 : i32
    %c0_i32_0 = arith.constant 0 : i32
    %c0_i32_1 = arith.constant 0 : i32
    return %c0_i32, %c0_i32_0 : i32, i32
  }
  func.func @transform_7(%arg0: i32, %arg1: i32) -> (i32, i32, i32) {
    %c0_i32 = arith.constant 0 : i32
    %c0_i32_0 = arith.constant 0 : i32
    return %arg0, %arg1, %c0_i32 : i32, i32, i32
  }
}

</mosaic_0001>

<llo_original>
// kernel: tpu_custom_call.1
$region0: #{tpu_custom_call.1}
  #allocation0 [shape = 'u32[]', space=smem, size = 0x4, offset = 0x4, fixed_abs, tag = 'smem constant byte address 0x4 - core index']
  #allocation1 [shape = 'u32[144,128]{1,0:T(1,128)}', space=vmem, size = 0x12000, scoped, tag = 'internal scratch']
  %s0 = inlined_call_operand.hbm [shape: f32[8], index: 0, kind: input, shape index: {}]
  %s1 = inlined_call_operand.hbm [shape: f32[1,2,16,128], index: 1, kind: input, shape index: {}]
  %s2 = inlined_call_operand.hbm [shape: f32[16,128], index: 2, kind: input, shape index: {}]
  %s3 = inlined_call_operand.hbm [shape: f32[16,128], index: 3, kind: input, shape index: {}]
  %s4 = inlined_call_operand.hbm [shape: f32[16,128], index: 4, kind: input, shape index: {}]
  %s5 = inlined_call_operand.hbm [shape: bf16[128,128], index: 5, kind: input, shape index: {}]
  %s6 = inlined_call_operand.vmem [shape: f32[1,128], index: 6, kind: input, shape index: {}]
  %s7 = inlined_call_operand.hbm [shape: f32[1,16,128], index: 7, kind: output, shape index: {}]
  %s8 = sld [smem:[#allocation0]]
  $region85: #{tpu_custom_call.1} parent=0
    _
  %s10 = ssub.s32 1, %s8
  %s11 = scalar_select 0, %s10, %s8
  $region1: #{tpu_custom_call.1} parent=0
    #allocation2 [shape = 'u8[512]{0}', space=smem, size = 0x200, scoped, tag = 'input window, operand 0, single buffered']
    #allocation3 [shape = 's32[2]{0}', space=sflag, size = 0x8, scoped, tag = 'scoped memory for tpu_custom_call.1']
    #allocation4 [shape = 's32[2]{0}', space=sflag, size = 0x8, scoped, tag = 'scoped memory for tpu_custom_call.1']
    #allocation5 [shape = 's32[2]{0}', space=sflag, size = 0x8, scoped, tag = 'scoped memory for tpu_custom_call.1']
    #allocation6 [shape = 'u8[16384]{0}', space=vmem, size = 0x4000, scoped, tag = 'input window, operand 1']
    #allocation7 [shape = 'u8[8192]{0}', space=vmem, size = 0x2000, scoped, tag = 'input window, operand 2']
    #allocation8 [shape = 's32[2]{0}', space=sflag, size = 0x8, scoped, tag = 'scoped memory for tpu_custom_call.1']
    #allocation9 [shape = 'u8[8192]{0}', space=vmem, size = 0x2000, scoped, tag = 'input window, operand 3']
    #allocation10 [shape = 'u8[8192]{0}', space=vmem, size = 0x2000, scoped, tag = 'input window, operand 4']
    #allocation11 [shape = 's32[2]{0}', space=sflag, size = 0x8, scoped, tag = 'scoped memory for tpu_custom_call.1']
    #allocation12 [shape = 'u8[32768]{0}', space=vmem, size = 0x8000, scoped, tag = 'input window, operand 5, single buffered']
    #allocation13 [shape = 'u8[8192]{0}', space=vmem, size = 0x2000, scoped, tag = 'output window, operand 0']
    %12 = vsyncpa [#allocation5], 0
    %13 = vsyncpa [#allocation3], 0
    %s14 = scalar_lea.sflag [#allocation3], 1
    %15 = vsyncpa %s14, 0
    %16 = vsyncpa [#allocation8], 0
    %s17 = scalar_lea.sflag [#allocation8], 1
    %18 = vsyncpa %s17, 0
    %19 = vsyncpa [#allocation11], 0
    %s20 = scalar_lea.sflag [#allocation11], 1
    %21 = vsyncpa %s20, 0
    %22 = vsyncpa [#allocation4], 0
    %s23 = scalar_lea.sflag [#allocation4], 1
    %24 = vsyncpa %s23, 0
    loop: start=0, step=1, limit=4
    $region2: #{tpu_custom_call.1} parent=1 // loop_pre_header
      _
    $region3: #{tpu_custom_call.1} parent=1 // loop_header
      %s26 = sphi 0, %s30
      %p27 = scmp.ge.s32.totalorder %s26, 4
      %s33 = sphi 0, %s45
      %s34 = sphi 0, %s41
      %s35 = sphi 0, %s33
      %s36 = sphi 0, %s34
      %s37 = sphi 0, %s35
      %s38 = sphi 0, %s36
      %s46 = sphi 0, %s46
      %s48 = sphi 0, %s46
      %s49 = sphi 0, %s48
      %s63 = sphi 0, %s49
      %s71 = sphi 0, %s73
      %s74 = sphi 0, %s71
      %s75 = sphi 0, %s74
      %s91 = sphi 0, %s75
      %s97 = sphi 0, %s99
      %s100 = sphi 0, %s97
      %s101 = sphi 0, %s100
      %s117 = sphi 0, %s101
      %s123 = sphi 0, %s125
      %s126 = sphi 0, %s123
      %s127 = sphi 0, %s126
      %s143 = sphi 0, %s127
      %s149 = sphi 0, %s151
      %s152 = sphi 0, %s149
      %s153 = sphi 0, %s152
      %s169 = sphi 0, %s153
      %s173 = sphi 0, %s173
      %s175 = sphi 0, %s173
      %s176 = sphi 0, %s175
      %s190 = sphi 0, %s176
      %s194 = sphi 0, %s194
      %s196 = sphi 0, %s194
      %s197 = sphi 0, %s196
      %s211 = sphi 0, %s197
      %s219 = sphi 0, %s221
      %s222 = sphi 0, %s219
      %s223 = sphi 0, %s222
      %s239 = sphi 0, %s223
    $region4: #{tpu_custom_call.1} parent=1 // loop_header_branch
      %29 = sbr.rel (%p27) target = $region8
    $region5: #{tpu_custom_call.1} parent=1 // loop_body
      %s31 = ssub.s32 %s26, 1
      %s32 = ssub.s32 %s26, 2
      %s39 = sadd.s32 1, %s34
      %p40 = scmp.ge.s32.totalorder %s39, 2
      %s41 = scalar_select %p40, 0, %s39
      %s42 = sadd.s32 1, %s33
      %s43 = scalar_select %p40, %s42, %s33
      %p44 = scmp.ge.s32.totalorder %s43, 1
      %s45 = scalar_select %p44, 0, %s43
      %s47 = sadd.s32 %s46, 1
      %p50 = scmp.eq.s32.totalorder %s26, 1
      %p51 = scmp.ne.s32.totalorder %s46, %s48
      %p52 = scmp.eq.s32.totalorder %s26, 0
      %p53 = por %p51, %p52
      %p54 = scmp.ne.s32.totalorder %s46, %s48
      %p55 = scmp.eq.s32.totalorder %s31, 1
      %p56 = por %p54, %p55
      %p57 = scmp.ne.s32.totalorder %s48, %s49
      %p58 = scmp.eq.s32.totalorder %s31, 0
      %p59 = por %p57, %p58
      %p60 = scmp.ne.s32.totalorder %s48, %s49
      %p61 = scmp.eq.s32.totalorder %s32, 1
      %p62 = por %p60, %p61
      %p64 = scmp.ne.s32.totalorder %s49, %s63
      %p65 = scmp.eq.s32.totalorder %s32, 0
      %p66 = por %p64, %p65
      %s67 = ssub.s32 %s33, %s45
      %s68 = ssub.s32 %s34, %s41
      %s69 = sor.u32 %s67, %s68
      %p70 = scmp.eq.s32.totalorder %s69, 0
      %s72 = sadd.s32 %s71, 1
      %s73 = scalar_select %p70, %s71, %s72
      %p76 = pneg %p70
      %p77 = scmp.eq.s32.totalorder %s26, 1
      %p78 = por %p76, %p77
      %p79 = scmp.ne.s32.totalorder %s71, %s74
      %p80 = scmp.eq.s32.totalorder %s26, 0
      %p81 = por %p79, %p80
      %p82 = scmp.ne.s32.totalorder %s71, %s74
      %p83 = scmp.eq.s32.totalorder %s31, 1
      %p84 = por %p82, %p83
      %p85 = scmp.ne.s32.totalorder %s74, %s75
      %p86 = scmp.eq.s32.totalorder %s31, 0
      %p87 = por %p85, %p86
      %p88 = scmp.ne.s32.totalorder %s74, %s75
      %p89 = scmp.eq.s32.totalorder %s32, 1
      %p90 = por %p88, %p89
      %p92 = scmp.ne.s32.totalorder %s75, %s91
      %p93 = scmp.eq.s32.totalorder %s32, 0
      %p94 = por %p92, %p93
      %s95 = ssub.s32 %s34, %s41
      %p96 = scmp.eq.s32.totalorder %s95, 0
      %s98 = sadd.s32 %s97, 1
      %s99 = scalar_select %p96, %s97, %s98
      %p102 = pneg %p96
      %p103 = scmp.eq.s32.totalorder %s26, 1
      %p104 = por %p102, %p103
      %p105 = scmp.ne.s32.totalorder %s97, %s100
      %p106 = scmp.eq.s32.totalorder %s26, 0
      %p107 = por %p105, %p106
      %p108 = scmp.ne.s32.totalorder %s97, %s100
      %p109 = scmp.eq.s32.totalorder %s31, 1
      %p110 = por %p108, %p109
      %p111 = scmp.ne.s32.totalorder %s100, %s101
      %p112 = scmp.eq.s32.totalorder %s31, 0
      %p113 = por %p111, %p112
      %p114 = scmp.ne.s32.totalorder %s100, %s101
      %p115 = scmp.eq.s32.totalorder %s32, 1
      %p116 = por %p114, %p115
      %p118 = scmp.ne.s32.totalorder %s101, %s117
      %p119 = scmp.eq.s32.totalorder %s32, 0
      %p120 = por %p118, %p119
      %s121 = ssub.s32 %s34, %s41
      %p122 = scmp.eq.s32.totalorder %s121, 0
      %s124 = sadd.s32 %s123, 1
      %s125 = scalar_select %p122, %s123, %s124
      %p128 = pneg %p122
      %p129 = scmp.eq.s32.totalorder %s26, 1
      %p130 = por %p128, %p129
      %p131 = scmp.ne.s32.totalorder %s123, %s126
      %p132 = scmp.eq.s32.totalorder %s26, 0
      %p133 = por %p131, %p132
      %p134 = scmp.ne.s32.totalorder %s123, %s126
      %p135 = scmp.eq.s32.totalorder %s31, 1
      %p136 = por %p134, %p135
      %p137 = scmp.ne.s32.totalorder %s126, %s127
      %p138 = scmp.eq.s32.totalorder %s31, 0
      %p139 = por %p137, %p138
      %p140 = scmp.ne.s32.totalorder %s126, %s127
      %p141 = scmp.eq.s32.totalorder %s32, 1
      %p142 = por %p140, %p141
      %p144 = scmp.ne.s32.totalorder %s127, %s143
      %p145 = scmp.eq.s32.totalorder %s32, 0
      %p146 = por %p144, %p145
      %s147 = ssub.s32 %s34, %s41
      %p148 = scmp.eq.s32.totalorder %s147, 0
      %s150 = sadd.s32 %s149, 1
      %s151 = scalar_select %p148, %s149, %s150
      %p154 = pneg %p148
      %p155 = scmp.eq.s32.totalorder %s26, 1
      %p156 = por %p154, %p155
      %p157 = scmp.ne.s32.totalorder %s149, %s152
      %p158 = scmp.eq.s32.totalorder %s26, 0
      %p159 = por %p157, %p158
      %p160 = scmp.ne.s32.totalorder %s149, %s152
      %p161 = scmp.eq.s32.totalorder %s31, 1
      %p162 = por %p160, %p161
      %p163 = scmp.ne.s32.totalorder %s152, %s153
      %p164 = scmp.eq.s32.totalorder %s31, 0
      %p165 = por %p163, %p164
      %p166 = scmp.ne.s32.totalorder %s152, %s153
      %p167 = scmp.eq.s32.totalorder %s32, 1
      %p168 = por %p166, %p167
      %p170 = scmp.ne.s32.totalorder %s153, %s169
      %p171 = scmp.eq.s32.totalorder %s32, 0
      %p172 = por %p170, %p171
      %s174 = sadd.s32 %s173, 1
      %p177 = scmp.eq.s32.totalorder %s26, 1
      %p178 = scmp.ne.s32.totalorder %s173, %s175
      %p179 = scmp.eq.s32.totalorder %s26, 0
      %p180 = por %p178, %p179
      %p181 = scmp.ne.s32.totalorder %s173, %s175
      %p182 = scmp.eq.s32.totalorder %s31, 1
      %p183 = por %p181, %p182
      %p184 = scmp.ne.s32.totalorder %s175, %s176
      %p185 = scmp.eq.s32.totalorder %s31, 0
      %p186 = por %p184, %p185
      %p187 = scmp.ne.s32.totalorder %s175, %s176
      %p188 = scmp.eq.s32.totalorder %s32, 1
      %p189 = por %p187, %p188
      %p191 = scmp.ne.s32.totalorder %s176, %s190
      %p192 = scmp.eq.s32.totalorder %s32, 0
      %p193 = por %p191, %p192
      %s195 = sadd.s32 %s194, 1
      %p198 = scmp.eq.s32.totalorder %s26, 1
      %p199 = scmp.ne.s32.totalorder %s194, %s196
      %p200 = scmp.eq.s32.totalorder %s26, 0
      %p201 = por %p199, %p200
      %p202 = scmp.ne.s32.totalorder %s194, %s196
      %p203 = scmp.eq.s32.totalorder %s31, 1
      %p204 = por %p202, %p203
      %p205 = scmp.ne.s32.totalorder %s196, %s197
      %p206 = scmp.eq.s32.totalorder %s31, 0
      %p207 = por %p205, %p206
      %p208 = scmp.ne.s32.totalorder %s196, %s197
      %p209 = scmp.eq.s32.totalorder %s32, 1
      %p210 = por %p208, %p209
      %p212 = scmp.ne.s32.totalorder %s197, %s211
      %p213 = scmp.eq.s32.totalorder %s32, 0
      %p214 = por %p212, %p213
      %s215 = ssub.s32 %s33, %s45
      %s216 = ssub.s32 %s34, %s41
      %s217 = sor.u32 %s215, %s216
      %p218 = scmp.eq.s32.totalorder %s217, 0
      %s220 = sadd.s32 %s219, 1
      %s221 = scalar_select %p218, %s219, %s220
      %p224 = pneg %p218
      %p225 = scmp.eq.s32.totalorder %s26, 1
      %p226 = por %p224, %p225
      %p227 = scmp.ne.s32.totalorder %s219, %s222
      %p228 = scmp.eq.s32.totalorder %s26, 0
      %p229 = por %p227, %p228
      %p230 = scmp.ne.s32.totalorder %s219, %s222
      %p231 = scmp.eq.s32.totalorder %s31, 1
      %p232 = por %p230, %p231
      %p233 = scmp.ne.s32.totalorder %s222, %s223
      %p234 = scmp.eq.s32.totalorder %s31, 0
      %p235 = por %p233, %p234
      %p236 = scmp.ne.s32.totalorder %s222, %s223
      %p237 = scmp.eq.s32.totalorder %s32, 1
      %p238 = por %p236, %p237
      %p240 = scmp.ne.s32.totalorder %s223, %s239
      %p241 = scmp.eq.s32.totalorder %s32, 0
      %p242 = por %p240, %p241
      %p243 = scmp.le.s32.totalorder 1, %s26
      %p244 = scmp.lt.s32.totalorder %s26, 3
      %p245 = pnand %p243, %p244
      %p246 = pneg %p245
      // Predicated region
      $region9: #{tpu_custom_call.1} parent=5 // pred_check
        _
      $region10: #{tpu_custom_call.1} parent=5 // pred_check_branch
        %248 = sbr.rel (%p245) target = $region12
      $region11: #{tpu_custom_call.1} parent=5 // pred_region
        %s249 = ssub.s32 %s26, 1
        // Predicated region
        $region13: #{tpu_custom_call.1} parent=11 // pred_check
          %p250 = pneg %p59
        $region14: #{tpu_custom_call.1} parent=11 // pred_check_branch
          %252 = sbr.rel (%p250) target = $region16
        $region15: #{tpu_custom_call.1} parent=11 // pred_region
          %s254 = ssub.s32 16, 16
          %255 = vsyncadd [#allocation5], %s254
          %258 = dma.hbm_to_smem %s0, 16, [#allocation2], [#allocation5]
        $region16: #{tpu_custom_call.1} parent=11 // pred_fallthru
          _
        // Predicated region
        $region17: #{tpu_custom_call.1} parent=11 // pred_check
          %p259 = pneg %p186
        $region18: #{tpu_custom_call.1} parent=11 // pred_check_branch
          %261 = sbr.rel (%p259) target = $region20
        $region19: #{tpu_custom_call.1} parent=11 // pred_region
          %s263 = ssub.s32 1024, 1024
          %264 = vsyncadd [#allocation11], %s263
          %s265 = sshll.u32 [#allocation12], 4
          %s266 = int_to_ptr.vmem [resolvable:$true] %s265
          %271 = dma.hbm_to_vmem [thread:$0]  %s5, 1024, %s266, [#allocation11], 64, 64, 4
        $region20: #{tpu_custom_call.1} parent=11 // pred_fallthru
          _
        // Predicated region
        $region21: #{tpu_custom_call.1} parent=11 // pred_check
          %p272 = pneg %p207
        $region22: #{tpu_custom_call.1} parent=11 // pred_check_branch
          %274 = sbr.rel (%p272) target = $region24
        $region23: #{tpu_custom_call.1} parent=11 // pred_region
          _
        $region24: #{tpu_custom_call.1} parent=11 // pred_fallthru
          _
      $region12: #{tpu_custom_call.1} parent=5 // pred_fallthru
        _
      %p275 = scmp.lt.s32.totalorder %s26, 2
      // Predicated region
      $region25: #{tpu_custom_call.1} parent=5 // pred_check
        %p276 = pneg %p275
      $region26: #{tpu_custom_call.1} parent=5 // pred_check_branch
        %278 = sbr.rel (%p276) target = $region28
      $region27: #{tpu_custom_call.1} parent=5 // pred_region
        // Predicated region
        $region29: #{tpu_custom_call.1} parent=27 // pred_check
          %p279 = pneg %p81
        $region30: #{tpu_custom_call.1} parent=27 // pred_check_branch
          %281 = sbr.rel (%p279) target = $region32
        $region31: #{tpu_custom_call.1} parent=27 // pred_region
          %s282 = sand.u32 %s71, 1
          %s283 = scalar_lea.sflag [#allocation3], %s282
          %s284 = sand.u32 %s71, 1
          %s285 = smul.addr %s284, 16
          %s286 = scalar_lea.vmem [#allocation6], %s285
          %s288 = ssub.s32 256, 256
          %289 = vsyncadd %s283, %s288
          %s290 = smul.addr %s33, 4
          %s291 = sadd.s32 %s34, %s290
          %s292 = smul.addr %s291, 128
          %s293 = scalar_lea.hbm %s1, %s292
          %s294 = sshll.u32 %s286, 4
          %s295 = int_to_ptr.vmem [resolvable:$true] %s294
          %300 = dma.hbm_to_vmem [thread:$0]  %s293, 256, %s295, %s283, 256, 128, 8
        $region32: #{tpu_custom_call.1} parent=27 // pred_fallthru
          _
        // Predicated region
        $region33: #{tpu_custom_call.1} parent=27 // pred_check
          %p301 = pneg %p107
        $region34: #{tpu_custom_call.1} parent=27 // pred_check_branch
          %303 = sbr.rel (%p301) target = $region36
        $region35: #{tpu_custom_call.1} parent=27 // pred_region
          %s304 = sand.u32 %s26, 1
          %s305 = scalar_lea.sflag [#allocation8], %s304
          %s306 = sand.u32 %s97, 1
          %s307 = smul.addr %s306, 8
          %s308 = scalar_lea.vmem [#allocation7], %s307
          %s310 = ssub.s32 128, 128
          %311 = vsyncadd %s305, %s310
          %s312 = smul.addr %s34, 128
          %s313 = scalar_lea.hbm %s2, %s312
          %s315 = sshll.u32 %s308, 4
          %s316 = int_to_ptr.vmem [resolvable:$true] %s315
          %318 = dma.hbm_to_vmem [thread:$0]  %s313, 128, %s316, %s305
        $region36: #{tpu_custom_call.1} parent=27 // pred_fallthru
          _
        // Predicated region
        $region37: #{tpu_custom_call.1} parent=27 // pred_check
          %p319 = pneg %p133
        $region38: #{tpu_custom_call.1} parent=27 // pred_check_branch
          %321 = sbr.rel (%p319) target = $region40
        $region39: #{tpu_custom_call.1} parent=27 // pred_region
          %s322 = sand.u32 %s26, 1
          %s323 = scalar_lea.sflag [#allocation8], %s322
          %s324 = sand.u32 %s123, 1
          %s325 = smul.addr %s324, 8
          %s326 = scalar_lea.vmem [#allocation9], %s325
          %s328 = ssub.s32 128, 128
          %329 = vsyncadd %s323, %s328
          %s330 = smul.addr %s34, 128
          %s331 = scalar_lea.hbm %s3, %s330
          %s333 = sshll.u32 %s326, 4
          %s334 = int_to_ptr.vmem [resolvable:$true] %s333
          %336 = dma.hbm_to_vmem [thread:$0]  %s331, 128, %s334, %s323
        $region40: #{tpu_custom_call.1} parent=27 // pred_fallthru
          _
        // Predicated region
        $region41: #{tpu_custom_call.1} parent=27 // pred_check
          %p337 = pneg %p159
        $region42: #{tpu_custom_call.1} parent=27 // pred_check_branch
          %339 = sbr.rel (%p337) target = $region44
        $region43: #{tpu_custom_call.1} parent=27 // pred_region
          %s340 = sand.u32 %s26, 1
          %s341 = scalar_lea.sflag [#allocation11], %s340
          %s342 = sand.u32 %s149, 1
          %s343 = smul.addr %s342, 8
          %s344 = scalar_lea.vmem [#allocation10], %s343
          %s346 = ssub.s32 128, 128
          %347 = vsyncadd %s341, %s346
          %s348 = smul.addr %s34, 128
          %s349 = scalar_lea.hbm %s4, %s348
          %s351 = sshll.u32 %s344, 4
          %s352 = int_to_ptr.vmem [resolvable:$true] %s351
          %354 = dma.hbm_to_vmem [thread:$0]  %s349, 128, %s352, %s341
        $region44: #{tpu_custom_call.1} parent=27 // pred_fallthru
          _
      $region28: #{tpu_custom_call.1} parent=5 // pred_fallthru
        _
      %p355 = scmp.le.s32.totalorder 1, %s26
      %p356 = scmp.lt.s32.totalorder %s26, 3
      %p357 = pnand %p355, %p356
      %p358 = pneg %p357
      // Predicated region
      $region45: #{tpu_custom_call.1} parent=5 // pred_check
        _
      $region46: #{tpu_custom_call.1} parent=5 // pred_check_branch
        %360 = sbr.rel (%p357) target = $region48
      $region47: #{tpu_custom_call.1} parent=5 // pred_region
        %s361 = ssub.s32 %s26, 1
        // Predicated region
        $region49: #{tpu_custom_call.1} parent=47 // pred_check
          %p362 = pneg %p59
        $region50: #{tpu_custom_call.1} parent=47 // pred_check_branch
          %364 = sbr.rel (%p362) target = $region52
        $region51: #{tpu_custom_call.1} parent=47 // pred_region
          %365 = dma.done [#allocation5], 16
        $region52: #{tpu_custom_call.1} parent=47 // pred_fallthru
          _
        %s366 = sand.u32 %s74, 1
        %s367 = scalar_lea.sflag [#allocation3], %s366
        %s368 = sand.u32 %s74, 1
        %s369 = smul.addr %s368, 16
        %s370 = scalar_lea.vmem [#allocation6], %s369
        // Predicated region
        $region53: #{tpu_custom_call.1} parent=47 // pred_check
          %p371 = pneg %p87
        $region54: #{tpu_custom_call.1} parent=47 // pred_check_branch
          %373 = sbr.rel (%p371) target = $region56
        $region55: #{tpu_custom_call.1} parent=47 // pred_region
          %374 = dma.done %s367, 256
        $region56: #{tpu_custom_call.1} parent=47 // pred_fallthru
          _
        %s375 = sand.u32 %s31, 1
        %s376 = scalar_lea.sflag [#allocation8], %s375
        %s377 = sand.u32 %s100, 1
        %s378 = smul.addr %s377, 8
        %s379 = scalar_lea.vmem [#allocation7], %s378
        // Predicated region
        $region57: #{tpu_custom_call.1} parent=47 // pred_check
          %p380 = pneg %p113
        $region58: #{tpu_custom_call.1} parent=47 // pred_check_branch
          %382 = sbr.rel (%p380) target = $region60
        $region59: #{tpu_custom_call.1} parent=47 // pred_region
          %383 = dma.done %s376, 128
        $region60: #{tpu_custom_call.1} parent=47 // pred_fallthru
          _
        %s384 = sand.u32 %s31, 1
        %s385 = scalar_lea.sflag [#allocation8], %s384
        %s386 = sand.u32 %s126, 1
        %s387 = smul.addr %s386, 8
        %s388 = scalar_lea.vmem [#allocation9], %s387
        // Predicated region
        $region61: #{tpu_custom_call.1} parent=47 // pred_check
          %p389 = pneg %p139
        $region62: #{tpu_custom_call.1} parent=47 // pred_check_branch
          %391 = sbr.rel (%p389) target = $region64
        $region63: #{tpu_custom_call.1} parent=47 // pred_region
          %392 = dma.done %s385, 128
        $region64: #{tpu_custom_call.1} parent=47 // pred_fallthru
          _
        %s393 = sand.u32 %s31, 1
        %s394 = scalar_lea.sflag [#allocation11], %s393
        %s395 = sand.u32 %s152, 1
        %s396 = smul.addr %s395, 8
        %s397 = scalar_lea.vmem [#allocation10], %s396
        // Predicated region
        $region65: #{tpu_custom_call.1} parent=47 // pred_check
          %p398 = pneg %p165
        $region66: #{tpu_custom_call.1} parent=47 // pred_check_branch
          %400 = sbr.rel (%p398) target = $region68
        $region67: #{tpu_custom_call.1} parent=47 // pred_region
          %401 = dma.done %s394, 128
        $region68: #{tpu_custom_call.1} parent=47 // pred_fallthru
          _
        // Predicated region
        $region69: #{tpu_custom_call.1} parent=47 // pred_check
          %p402 = pneg %p186
        $region70: #{tpu_custom_call.1} parent=47 // pred_check_branch
          %404 = sbr.rel (%p402) target = $region72
        $region71: #{tpu_custom_call.1} parent=47 // pred_region
          %405 = dma.done [#allocation11], 1024
        $region72: #{tpu_custom_call.1} parent=47 // pred_fallthru
          _
        %406 = sfence
        %p407 = pneg %p59
        %p408 = pneg %p56
        %s409 = sand.u32 %s74, 1
        %s410 = scalar_lea.sflag [#allocation3], %s409
        %s411 = sand.u32 %s74, 1
        %s412 = smul.addr %s411, 16
        %s413 = scalar_lea.vmem [#allocation6], %s412
        %p414 = pneg %p87
        %p415 = pneg %p84
        %s416 = sand.u32 %s31, 1
        %s417 = scalar_lea.sflag [#allocation8], %s416
        %s418 = sand.u32 %s100, 1
        %s419 = smul.addr %s418, 8
        %s420 = scalar_lea.vmem [#allocation7], %s419
        %p421 = pneg %p113
        %p422 = pneg %p110
        %s423 = sand.u32 %s31, 1
        %s424 = scalar_lea.sflag [#allocation8], %s423
        %s425 = sand.u32 %s126, 1
        %s426 = smul.addr %s425, 8
        %s427 = scalar_lea.vmem [#allocation9], %s426
        %p428 = pneg %p139
        %p429 = pneg %p136
        %s430 = sand.u32 %s31, 1
        %s431 = scalar_lea.sflag [#allocation11], %s430
        %s432 = sand.u32 %s152, 1
        %s433 = smul.addr %s432, 8
        %s434 = scalar_lea.vmem [#allocation10], %s433
        %p435 = pneg %p165
        %p436 = pneg %p162
        %p437 = pneg %p186
        %p438 = pneg %p183
        %p439 = pneg %p207
        %p440 = pneg %p204
        %p441 = pneg %p235
        %p442 = pneg %p232
        %s443 = sand.u32 %s222, 1
        %s444 = scalar_lea.sflag [#allocation4], %s443
        %s445 = sand.u32 %s222, 1
        %s446 = smul.addr %s445, 8
        %s447 = scalar_lea.vmem [#allocation13], %s446
        %v449 = vld [vmem:[%s370] sm:$0xff]
        %v450 = vld [vmem:[%s370 + $0x8] sm:$0xff]
        %v451 = vld [vmem:[%s379] sm:$0xff]
        %v452 = vmul.f32 %v451, %v449
        %v453 = vld [vmem:[%s388] sm:$0xff]
        %v454 = vmul.f32 %v453, %v450
        %v455 = vadd.f32 %v452, %v454
        %v456 = vld [vmem:[%s397] sm:$0xff]
        %v457 = vadd.f32 %v455, %v456
        %v458 = vld [vmem:[#allocation12] sm:$0xf]
        %v459 = vld [vmem:[#allocation12 + $0x4] sm:$0xf]
        %v460 = vld [vmem:[#allocation12 + $0x8] sm:$0xf]
        %v461 = vld [vmem:[#allocation12 + $0xc] sm:$0xf]
        %v462 = vld [vmem:[#allocation12 + $0x10] sm:$0xf]
        %v463 = vld [vmem:[#allocation12 + $0x14] sm:$0xf]
        %v464 = vld [vmem:[#allocation12 + $0x18] sm:$0xf]
        %v465 = vld [vmem:[#allocation12 + $0x1c] sm:$0xf]
        %v466 = vld [vmem:[#allocation12 + $0x20] sm:$0xf]
        %v467 = vld [vmem:[#allocation12 + $0x24] sm:$0xf]
        %v468 = vld [vmem:[#allocation12 + $0x28] sm:$0xf]
        %v469 = vld [vmem:[#allocation12 + $0x2c] sm:$0xf]
        %v470 = vld [vmem:[#allocation12 + $0x30] sm:$0xf]
        %v471 = vld [vmem:[#allocation12 + $0x34] sm:$0xf]
        %v472 = vld [vmem:[#allocation12 + $0x38] sm:$0xf]
        %v473 = vld [vmem:[#allocation12 + $0x3c] sm:$0xf]
        %v474 = vld [vmem:[%s6] sm:$0x1]
        %s475 = sld [smem:[#allocation2]]
        %v476 = vpack.c.bf16 %v457, %v457
        %v478 = vlaneseq
        %v479 = vshrl.u32 %v478, 7
        %v480 = vsub.s32 0, %v479
        %v481 = vrot.slane %v474, %v480
        %v499 = vunpack.c.l.b16 %v458
        %v500 = vunpack.c.l.b16 %v459
        %v501 = vunpack.c.l.b16 %v460
        %v502 = vunpack.c.l.b16 %v461
        %v503 = vunpack.c.l.b16 %v462
        %v504 = vunpack.c.l.b16 %v463
        %v505 = vunpack.c.l.b16 %v464
        %v506 = vunpack.c.l.b16 %v465
        %v507 = vunpack.c.l.b16 %v466
        %v508 = vunpack.c.l.b16 %v467
        %v509 = vunpack.c.l.b16 %v468
        %v510 = vunpack.c.l.b16 %v469
        %v511 = vunpack.c.l.b16 %v470
        %v512 = vunpack.c.l.b16 %v471
        %v513 = vunpack.c.l.b16 %v472
        %v514 = vunpack.c.l.b16 %v473
        %v515 = vpack.c.b16 %v500, %v499
        %v516 = vpack.c.b16 %v502, %v501
        %v517 = vpack.c.b16 %v504, %v503
        %v518 = vpack.c.b16 %v506, %v505
        %v519 = vpack.c.b16 %v508, %v507
        %v520 = vpack.c.b16 %v510, %v509
        %v521 = vpack.c.b16 %v512, %v511
        %v522 = vpack.c.b16 %v514, %v513
        %531 = vmatprep.subr.bf16.mxu0 0
        %532 = vmatpush1.bf16.msra.mxu0 %v522
        %533 = vmatprep.subr.bf16.mxu0 0
        %534 = vmatpush1.bf16.msra.mxu0 %v521
        %535 = vmatprep.subr.bf16.mxu0 0
        %536 = vmatpush1.bf16.msra.mxu0 %v520
        %537 = vmatprep.subr.bf16.mxu0 0
        %538 = vmatpush1.bf16.msra.mxu0 %v519
        %539 = vmatprep.subr.bf16.mxu0 0
        %540 = vmatpush1.bf16.msra.mxu0 %v518
        %541 = vmatprep.subr.bf16.mxu0 0
        %542 = vmatpush1.bf16.msra.mxu0 %v517
        %543 = vmatprep.subr.bf16.mxu0 0
        %544 = vmatpush1.bf16.msra.mxu0 %v516
        %545 = vmatprep.subr.bf16.mxu0 0
        %546 = vmatpush1.bf16.msra.mxu0 %v515
        %547 = vmatprep.subr.bf16.mxu0 0
        %548 = vmatpush2.bf16.msra.mxu0 0
        %549 = vmatprep.subr.bf16.mxu0 0
        %550 = vmatpush2.bf16.msra.mxu0 0
        %551 = vmatprep.subr.bf16.mxu0 0
        %552 = vmatpush2.bf16.msra.mxu0 0
        %553 = vmatprep.subr.bf16.mxu0 0
        %554 = vmatpush2.bf16.msra.mxu0 0
        %555 = vmatprep.subr.bf16.mxu0 0
        %556 = vmatpush2.bf16.msra.mxu0 0
        %557 = vmatprep.subr.bf16.mxu0 0
        %558 = vmatpush2.bf16.msra.mxu0 0
        %559 = vmatprep.subr.bf16.mxu0 0
        %560 = vmatpush2.bf16.msra.mxu0 0
        %561 = vmatprep.subr.bf16.mxu0 0
        %562 = vmatpush2.bf16.msra.mxu0 0
        %563 = vmatprep.mubr.bf16.mxu0 0
        %564 = vmatmul.mubr.bf16.gmra.mxu0 %v476
        %v565 = vpop.f32.mrf.mxu0
        %v566 = vadd.f32 %v481, %v565
        %v567 = vpop.f32.mrf.mxu0
        %v568 = vpop.f32.mrf.mxu0
        %v569 = vpop.f32.mrf.mxu0
        %570 = vdwg.mxu0
        %v571 = vtanh.pop %v566
        %s572 = smul.f32 %s475, 0.5
        %v573 = vstv %s572
        %v574 = vmul.f32 %v573, %v571
        %v575 = vadd.f32 %v457, %v574
        %v576 = vpack.c.bf16 %v575, %v575
        %577 = vmatprep.subr.bf16.mxu0 0
        %578 = vmatpush1.bf16.msra.mxu0 %v522
        %579 = vmatprep.subr.bf16.mxu0 0
        %580 = vmatpush1.bf16.msra.mxu0 %v521
        %581 = vmatprep.subr.bf16.mxu0 0
        %582 = vmatpush1.bf16.msra.mxu0 %v520
        %583 = vmatprep.subr.bf16.mxu0 0
        %584 = vmatpush1.bf16.msra.mxu0 %v519
        %585 = vmatprep.subr.bf16.mxu0 0
        %586 = vmatpush1.bf16.msra.mxu0 %v518
        %587 = vmatprep.subr.bf16.mxu0 0
        %588 = vmatpush1.bf16.msra.mxu0 %v517
        %589 = vmatprep.subr.bf16.mxu0 0
        %590 = vmatpush1.bf16.msra.mxu0 %v516
        %591 = vmatprep.subr.bf16.mxu0 0
        %592 = vmatpush1.bf16.msra.mxu0 %v515
        %593 = vmatprep.subr.bf16.mxu0 0
        %594 = vmatpush2.bf16.msra.mxu0 0
        %595 = vmatprep.subr.bf16.mxu0 0
        %596 = vmatpush2.bf16.msra.mxu0 0
        %597 = vmatprep.subr.bf16.mxu0 0
        %598 = vmatpush2.bf16.msra.mxu0 0
        %599 = vmatprep.subr.bf16.mxu0 0
        %600 = vmatpush2.bf16.msra.mxu0 0
        %601 = vmatprep.subr.bf16.mxu0 0
        %602 = vmatpush2.bf16.msra.mxu0 0
        %603 = vmatprep.subr.bf16.mxu0 0
        %604 = vmatpush2.bf16.msra.mxu0 0
        %605 = vmatprep.subr.bf16.mxu0 0
        %606 = vmatpush2.bf16.msra.mxu0 0
        %607 = vmatprep.subr.bf16.mxu0 0
        %608 = vmatpush2.bf16.msra.mxu0 0
        %609 = vmatprep.mubr.bf16.mxu0 0
        %610 = vmatmul.mubr.bf16.gmra.mxu0 %v576
        %v611 = vpop.f32.mrf.mxu0
        %v612 = vadd.f32 %v481, %v611
        %v613 = vpop.f32.mrf.mxu0
        %v614 = vpop.f32.mrf.mxu0
        %v615 = vpop.f32.mrf.mxu0
        %616 = vdwg.mxu0
        %v617 = vtanh.pop %v612
        %v618 = vmul.f32 %v573, %v617
        %v619 = vadd.f32 %v457, %v618
        %v620 = vpack.c.bf16 %v619, %v619
        %621 = vmatprep.subr.bf16.mxu0 0
        %622 = vmatpush1.bf16.msra.mxu0 %v522
        %623 = vmatprep.subr.bf16.mxu0 0
        %624 = vmatpush1.bf16.msra.mxu0 %v521
        %625 = vmatprep.subr.bf16.mxu0 0
        %626 = vmatpush1.bf16.msra.mxu0 %v520
        %627 = vmatprep.subr.bf16.mxu0 0
        %628 = vmatpush1.bf16.msra.mxu0 %v519
        %629 = vmatprep.subr.bf16.mxu0 0
        %630 = vmatpush1.bf16.msra.mxu0 %v518
        %631 = vmatprep.subr.bf16.mxu0 0
        %632 = vmatpush1.bf16.msra.mxu0 %v517
        %633 = vmatprep.subr.bf16.mxu0 0
        %634 = vmatpush1.bf16.msra.mxu0 %v516
        %635 = vmatprep.subr.bf16.mxu0 0
        %636 = vmatpush1.bf16.msra.mxu0 %v515
        %637 = vmatprep.subr.bf16.mxu0 0
        %638 = vmatpush2.bf16.msra.mxu0 0
        %639 = vmatprep.subr.bf16.mxu0 0
        %640 = vmatpush2.bf16.msra.mxu0 0
        %641 = vmatprep.subr.bf16.mxu0 0
        %642 = vmatpush2.bf16.msra.mxu0 0
        %643 = vmatprep.subr.bf16.mxu0 0
        %644 = vmatpush2.bf16.msra.mxu0 0
        %645 = vmatprep.subr.bf16.mxu0 0
        %646 = vmatpush2.bf16.msra.mxu0 0
        %647 = vmatprep.subr.bf16.mxu0 0
        %648 = vmatpush2.bf16.msra.mxu0 0
        %649 = vmatprep.subr.bf16.mxu0 0
        %650 = vmatpush2.bf16.msra.mxu0 0
        %651 = vmatprep.subr.bf16.mxu0 0
        %652 = vmatpush2.bf16.msra.mxu0 0
        %653 = vmatprep.mubr.bf16.mxu0 0
        %654 = vmatmul.mubr.bf16.gmra.mxu0 %v620
        %v655 = vpop.f32.mrf.mxu0
        %v656 = vadd.f32 %v481, %v655
        %v657 = vpop.f32.mrf.mxu0
        %v658 = vpop.f32.mrf.mxu0
        %v659 = vpop.f32.mrf.mxu0
        %660 = vdwg.mxu0
        %v661 = vtanh.pop %v656
        %v662 = vstv %s475
        %v663 = vmul.f32 %v662, %v661
        %v664 = vadd.f32 %v457, %v663
        %v665 = vpack.c.bf16 %v664, %v664
        %666 = vmatprep.subr.bf16.mxu0 0
        %667 = vmatpush1.bf16.msra.mxu0 %v522
        %668 = vmatprep.subr.bf16.mxu0 0
        %669 = vmatpush1.bf16.msra.mxu0 %v521
        %670 = vmatprep.subr.bf16.mxu0 0
        %671 = vmatpush1.bf16.msra.mxu0 %v520
        %672 = vmatprep.subr.bf16.mxu0 0
        %673 = vmatpush1.bf16.msra.mxu0 %v519
        %674 = vmatprep.subr.bf16.mxu0 0
        %675 = vmatpush1.bf16.msra.mxu0 %v518
        %676 = vmatprep.subr.bf16.mxu0 0
        %677 = vmatpush1.bf16.msra.mxu0 %v517
        %678 = vmatprep.subr.bf16.mxu0 0
        %679 = vmatpush1.bf16.msra.mxu0 %v516
        %680 = vmatprep.subr.bf16.mxu0 0
        %681 = vmatpush1.bf16.msra.mxu0 %v515
        %682 = vmatprep.subr.bf16.mxu0 0
        %683 = vmatpush2.bf16.msra.mxu0 0
        %684 = vmatprep.subr.bf16.mxu0 0
        %685 = vmatpush2.bf16.msra.mxu0 0
        %686 = vmatprep.subr.bf16.mxu0 0
        %687 = vmatpush2.bf16.msra.mxu0 0
        %688 = vmatprep.subr.bf16.mxu0 0
        %689 = vmatpush2.bf16.msra.mxu0 0
        %690 = vmatprep.subr.bf16.mxu0 0
        %691 = vmatpush2.bf16.msra.mxu0 0
        %692 = vmatprep.subr.bf16.mxu0 0
        %693 = vmatpush2.bf16.msra.mxu0 0
        %694 = vmatprep.subr.bf16.mxu0 0
        %695 = vmatpush2.bf16.msra.mxu0 0
        %696 = vmatprep.subr.bf16.mxu0 0
        %697 = vmatpush2.bf16.msra.mxu0 0
        %698 = vmatprep.mubr.bf16.mxu0 0
        %699 = vmatmul.mubr.bf16.gmra.mxu0 %v665
        %v700 = vpop.f32.mrf.mxu0
        %v701 = vadd.f32 %v481, %v700
        %v702 = vpop.f32.mrf.mxu0
        %v703 = vpop.f32.mrf.mxu0
        %v704 = vpop.f32.mrf.mxu0
        %705 = vdwg.mxu0
        %v706 = vtanh.pop %v701
        %v707 = vrcp.pop 6.0
        %s708 = vtos %v707
        %s709 = smul.f32 %s475, %s708
        %v710 = vadd.f32 %v617, %v661
        %v711 = vmul.f32 %v710, 2.0
        %v712 = vadd.f32 %v571, %v711
        %v713 = vadd.f32 %v712, %v706
        %v714 = vstv %s709
        %v715 = vmul.f32 %v714, %v713
        %v716 = vadd.f32 %v457, %v715
        %s717 = sld [smem:[#allocation2 + $0x1]]
        %v718 = vpack.c.bf16 %v716, %v716
        %719 = vmatprep.subr.bf16.mxu0 0
        %720 = vmatpush1.bf16.msra.mxu0 %v522
        %721 = vmatprep.subr.bf16.mxu0 0
        %722 = vmatpush1.bf16.msra.mxu0 %v521
        %723 = vmatprep.subr.bf16.mxu0 0
        %724 = vmatpush1.bf16.msra.mxu0 %v520
        %725 = vmatprep.subr.bf16.mxu0 0
        %726 = vmatpush1.bf16.msra.mxu0 %v519
        %727 = vmatprep.subr.bf16.mxu0 0
        %728 = vmatpush1.bf16.msra.mxu0 %v518
        %729 = vmatprep.subr.bf16.mxu0 0
        %730 = vmatpush1.bf16.msra.mxu0 %v517
        %731 = vmatprep.subr.bf16.mxu0 0
        %732 = vmatpush1.bf16.msra.mxu0 %v516
        %733 = vmatprep.subr.bf16.mxu0 0
        %734 = vmatpush1.bf16.msra.mxu0 %v515
        %735 = vmatprep.subr.bf16.mxu0 0
        %736 = vmatpush2.bf16.msra.mxu0 0
        %737 = vmatprep.subr.bf16.mxu0 0
        %738 = vmatpush2.bf16.msra.mxu0 0
        %739 = vmatprep.subr.bf16.mxu0 0
        %740 = vmatpush2.bf16.msra.mxu0 0
        %741 = vmatprep.subr.bf16.mxu0 0
        %742 = vmatpush2.bf16.msra.mxu0 0
        %743 = vmatprep.subr.bf16.mxu0 0
        %744 = vmatpush2.bf16.msra.mxu0 0
        %745 = vmatprep.subr.bf16.mxu0 0
        %746 = vmatpush2.bf16.msra.mxu0 0
        %747 = vmatprep.subr.bf16.mxu0 0
        %748 = vmatpush2.bf16.msra.mxu0 0
        %749 = vmatprep.subr.bf16.mxu0 0
        %750 = vmatpush2.bf16.msra.mxu0 0
        %751 = vmatprep.mubr.bf16.mxu0 0
        %752 = vmatmul.mubr.bf16.gmra.mxu0 %v718
        %v753 = vpop.f32.mrf.mxu0
        %v754 = vadd.f32 %v481, %v753
        %v755 = vpop.f32.mrf.mxu0
        %v756 = vpop.f32.mrf.mxu0
        %v757 = vpop.f32.mrf.mxu0
        %758 = vdwg.mxu0
        %v759 = vtanh.pop %v754
        %s760 = smul.f32 %s717, 0.5
        %v761 = vstv %s760
        %v762 = vmul.f32 %v761, %v759
        %v763 = vadd.f32 %v716, %v762
        %v764 = vpack.c.bf16 %v763, %v763
        %765 = vmatprep.subr.bf16.mxu0 0
        %766 = vmatpush1.bf16.msra.mxu0 %v522
        %767 = vmatprep.subr.bf16.mxu0 0
        %768 = vmatpush1.bf16.msra.mxu0 %v521
        %769 = vmatprep.subr.bf16.mxu0 0
        %770 = vmatpush1.bf16.msra.mxu0 %v520
        %771 = vmatprep.subr.bf16.mxu0 0
        %772 = vmatpush1.bf16.msra.mxu0 %v519
        %773 = vmatprep.subr.bf16.mxu0 0
        %774 = vmatpush1.bf16.msra.mxu0 %v518
        %775 = vmatprep.subr.bf16.mxu0 0
        %776 = vmatpush1.bf16.msra.mxu0 %v517
        %777 = vmatprep.subr.bf16.mxu0 0
        %778 = vmatpush1.bf16.msra.mxu0 %v516
        %779 = vmatprep.subr.bf16.mxu0 0
        %780 = vmatpush1.bf16.msra.mxu0 %v515
        %781 = vmatprep.subr.bf16.mxu0 0
        %782 = vmatpush2.bf16.msra.mxu0 0
        %783 = vmatprep.subr.bf16.mxu0 0
        %784 = vmatpush2.bf16.msra.mxu0 0
        %785 = vmatprep.subr.bf16.mxu0 0
        %786 = vmatpush2.bf16.msra.mxu0 0
        %787 = vmatprep.subr.bf16.mxu0 0
        %788 = vmatpush2.bf16.msra.mxu0 0
        %789 = vmatprep.subr.bf16.mxu0 0
        %790 = vmatpush2.bf16.msra.mxu0 0
        %791 = vmatprep.subr.bf16.mxu0 0
        %792 = vmatpush2.bf16.msra.mxu0 0
        %793 = vmatprep.subr.bf16.mxu0 0
        %794 = vmatpush2.bf16.msra.mxu0 0
        %795 = vmatprep.subr.bf16.mxu0 0
        %796 = vmatpush2.bf16.msra.mxu0 0
        %797 = vmatprep.mubr.bf16.mxu0 0
        %798 = vmatmul.mubr.bf16.gmra.mxu0 %v764
        %v799 = vpop.f32.mrf.mxu0
        %v800 = vadd.f32 %v481, %v799
        %v801 = vpop.f32.mrf.mxu0
        %v802 = vpop.f32.mrf.mxu0
        %v803 = vpop.f32.mrf.mxu0
        %804 = vdwg.mxu0
        %v805 = vtanh.pop %v800
        %v806 = vmul.f32 %v761, %v805
        %v807 = vadd.f32 %v716, %v806
        %v808 = vpack.c.bf16 %v807, %v807
        %809 = vmatprep.subr.bf16.mxu0 0
        %810 = vmatpush1.bf16.msra.mxu0 %v522
        %811 = vmatprep.subr.bf16.mxu0 0
        %812 = vmatpush1.bf16.msra.mxu0 %v521
        %813 = vmatprep.subr.bf16.mxu0 0
        %814 = vmatpush1.bf16.msra.mxu0 %v520
        %815 = vmatprep.subr.bf16.mxu0 0
        %816 = vmatpush1.bf16.msra.mxu0 %v519
        %817 = vmatprep.subr.bf16.mxu0 0
        %818 = vmatpush1.bf16.msra.mxu0 %v518
        %819 = vmatprep.subr.bf16.mxu0 0
        %820 = vmatpush1.bf16.msra.mxu0 %v517
        %821 = vmatprep.subr.bf16.mxu0 0
        %822 = vmatpush1.bf16.msra.mxu0 %v516
        %823 = vmatprep.subr.bf16.mxu0 0
        %824 = vmatpush1.bf16.msra.mxu0 %v515
        %825 = vmatprep.subr.bf16.mxu0 0
        %826 = vmatpush2.bf16.msra.mxu0 0
        %827 = vmatprep.subr.bf16.mxu0 0
        %828 = vmatpush2.bf16.msra.mxu0 0
        %829 = vmatprep.subr.bf16.mxu0 0
        %830 = vmatpush2.bf16.msra.mxu0 0
        %831 = vmatprep.subr.bf16.mxu0 0
        %832 = vmatpush2.bf16.msra.mxu0 0
        %833 = vmatprep.subr.bf16.mxu0 0
        %834 = vmatpush2.bf16.msra.mxu0 0
        %835 = vmatprep.subr.bf16.mxu0 0
        %836 = vmatpush2.bf16.msra.mxu0 0
        %837 = vmatprep.subr.bf16.mxu0 0
        %838 = vmatpush2.bf16.msra.mxu0 0
        %839 = vmatprep.subr.bf16.mxu0 0
        %840 = vmatpush2.bf16.msra.mxu0 0
        %841 = vmatprep.mubr.bf16.mxu0 0
        %842 = vmatmul.mubr.bf16.gmra.mxu0 %v808
        %v843 = vpop.f32.mrf.mxu0
        %v844 = vadd.f32 %v481, %v843
        %v845 = vpop.f32.mrf.mxu0
        %v846 = vpop.f32.mrf.mxu0
        %v847 = vpop.f32.mrf.mxu0
        %848 = vdwg.mxu0
        %v849 = vtanh.pop %v844
        %v850 = vstv %s717
        %v851 = vmul.f32 %v850, %v849
        %v852 = vadd.f32 %v716, %v851
        %v853 = vpack.c.bf16 %v852, %v852
        %854 = vmatprep.subr.bf16.mxu0 0
        %855 = vmatpush1.bf16.msra.mxu0 %v522
        %856 = vmatprep.subr.bf16.mxu0 0
        %857 = vmatpush1.bf16.msra.mxu0 %v521
        %858 = vmatprep.subr.bf16.mxu0 0
        %859 = vmatpush1.bf16.msra.mxu0 %v520
        %860 = vmatprep.subr.bf16.mxu0 0
        %861 = vmatpush1.bf16.msra.mxu0 %v519
        %862 = vmatprep.subr.bf16.mxu0 0
        %863 = vmatpush1.bf16.msra.mxu0 %v518
        %864 = vmatprep.subr.bf16.mxu0 0
        %865 = vmatpush1.bf16.msra.mxu0 %v517
        %866 = vmatprep.subr.bf16.mxu0 0
        %867 = vmatpush1.bf16.msra.mxu0 %v516
        %868 = vmatprep.subr.bf16.mxu0 0
        %869 = vmatpush1.bf16.msra.mxu0 %v515
        %870 = vmatprep.subr.bf16.mxu0 0
        %871 = vmatpush2.bf16.msra.mxu0 0
        %872 = vmatprep.subr.bf16.mxu0 0
        %873 = vmatpush2.bf16.msra.mxu0 0
        %874 = vmatprep.subr.bf16.mxu0 0
        %875 = vmatpush2.bf16.msra.mxu0 0
        %876 = vmatprep.subr.bf16.mxu0 0
        %877 = vmatpush2.bf16.msra.mxu0 0
        %878 = vmatprep.subr.bf16.mxu0 0
        %879 = vmatpush2.bf16.msra.mxu0 0
        %880 = vmatprep.subr.bf16.mxu0 0
        %881 = vmatpush2.bf16.msra.mxu0 0
        %882 = vmatprep.subr.bf16.mxu0 0
        %883 = vmatpush2.bf16.msra.mxu0 0
        %884 = vmatprep.subr.bf16.mxu0 0
        %885 = vmatpush2.bf16.msra.mxu0 0
        %886 = vmatprep.mubr.bf16.mxu0 0
        %887 = vmatmul.mubr.bf16.gmra.mxu0 %v853
        %v888 = vpop.f32.mrf.mxu0
        %v889 = vadd.f32 %v481, %v888
        %v890 = vpop.f32.mrf.mxu0
        %v891 = vpop.f32.mrf.mxu0
        %v892 = vpop.f32.mrf.mxu0
        %893 = vdwg.mxu0
        %v894 = vtanh.pop %v889
        %v895 = vrcp.pop 6.0
        %s896 = vtos %v895
        %s897 = smul.f32 %s717, %s896
        %v898 = vadd.f32 %v805, %v849
        %v899 = vmul.f32 %v898, 2.0
        %v900 = vadd.f32 %v759, %v899
        %v901 = vadd.f32 %v900, %v894
        %v902 = vstv %s897
        %v903 = vmul.f32 %v902, %v901
        %v904 = vadd.f32 %v716, %v903
        %s905 = sld [smem:[#allocation2 + $0x2]]
        %v906 = vpack.c.bf16 %v904, %v904
        %907 = vmatprep.subr.bf16.mxu0 0
        %908 = vmatpush1.bf16.msra.mxu0 %v522
        %909 = vmatprep.subr.bf16.mxu0 0
        %910 = vmatpush1.bf16.msra.mxu0 %v521
        %911 = vmatprep.subr.bf16.mxu0 0
        %912 = vmatpush1.bf16.msra.mxu0 %v520
        %913 = vmatprep.subr.bf16.mxu0 0
        %914 = vmatpush1.bf16.msra.mxu0 %v519
        %915 = vmatprep.subr.bf16.mxu0 0
        %916 = vmatpush1.bf16.msra.mxu0 %v518
        %917 = vmatprep.subr.bf16.mxu0 0
        %918 = vmatpush1.bf16.msra.mxu0 %v517
        %919 = vmatprep.subr.bf16.mxu0 0
        %920 = vmatpush1.bf16.msra.mxu0 %v516
        %921 = vmatprep.subr.bf16.mxu0 0
        %922 = vmatpush1.bf16.msra.mxu0 %v515
        %923 = vmatprep.subr.bf16.mxu0 0
        %924 = vmatpush2.bf16.msra.mxu0 0
        %925 = vmatprep.subr.bf16.mxu0 0
        %926 = vmatpush2.bf16.msra.mxu0 0
        %927 = vmatprep.subr.bf16.mxu0 0
        %928 = vmatpush2.bf16.msra.mxu0 0
        %929 = vmatprep.subr.bf16.mxu0 0
        %930 = vmatpush2.bf16.msra.mxu0 0
        %931 = vmatprep.subr.bf16.mxu0 0
        %932 = vmatpush2.bf16.msra.mxu0 0
        %933 = vmatprep.subr.bf16.mxu0 0
        %934 = vmatpush2.bf16.msra.mxu0 0
        %935 = vmatprep.subr.bf16.mxu0 0
        %936 = vmatpush2.bf16.msra.mxu0 0
        %937 = vmatprep.subr.bf16.mxu0 0
        %938 = vmatpush2.bf16.msra.mxu0 0
        %939 = vmatprep.mubr.bf16.mxu0 0
        %940 = vmatmul.mubr.bf16.gmra.mxu0 %v906
        %v941 = vpop.f32.mrf.mxu0
        %v942 = vadd.f32 %v481, %v941
        %v943 = vpop.f32.mrf.mxu0
        %v944 = vpop.f32.mrf.mxu0
        %v945 = vpop.f32.mrf.mxu0
        %946 = vdwg.mxu0
        %v947 = vtanh.pop %v942
        %s948 = smul.f32 %s905, 0.5
        %v949 = vstv %s948
        %v950 = vmul.f32 %v949, %v947
        %v951 = vadd.f32 %v904, %v950
        %v952 = vpack.c.bf16 %v951, %v951
        %953 = vmatprep.subr.bf16.mxu0 0
        %954 = vmatpush1.bf16.msra.mxu0 %v522
        %955 = vmatprep.subr.bf16.mxu0 0
        %956 = vmatpush1.bf16.msra.mxu0 %v521
        %957 = vmatprep.subr.bf16.mxu0 0
        %958 = vmatpush1.bf16.msra.mxu0 %v520
        %959 = vmatprep.subr.bf16.mxu0 0
        %960 = vmatpush1.bf16.msra.mxu0 %v519
        %961 = vmatprep.subr.bf16.mxu0 0
        %962 = vmatpush1.bf16.msra.mxu0 %v518
        %963 = vmatprep.subr.bf16.mxu0 0
        %964 = vmatpush1.bf16.msra.mxu0 %v517
        %965 = vmatprep.subr.bf16.mxu0 0
        %966 = vmatpush1.bf16.msra.mxu0 %v516
        %967 = vmatprep.subr.bf16.mxu0 0
        %968 = vmatpush1.bf16.msra.mxu0 %v515
        %969 = vmatprep.subr.bf16.mxu0 0
        %970 = vmatpush2.bf16.msra.mxu0 0
        %971 = vmatprep.subr.bf16.mxu0 0
        %972 = vmatpush2.bf16.msra.mxu0 0
        %973 = vmatprep.subr.bf16.mxu0 0
        %974 = vmatpush2.bf16.msra.mxu0 0
        %975 = vmatprep.subr.bf16.mxu0 0
        %976 = vmatpush2.bf16.msra.mxu0 0
        %977 = vmatprep.subr.bf16.mxu0 0
        %978 = vmatpush2.bf16.msra.mxu0 0
        %979 = vmatprep.subr.bf16.mxu0 0
        %980 = vmatpush2.bf16.msra.mxu0 0
        %981 = vmatprep.subr.bf16.mxu0 0
        %982 = vmatpush2.bf16.msra.mxu0 0
        %983 = vmatprep.subr.bf16.mxu0 0
        %984 = vmatpush2.bf16.msra.mxu0 0
        %985 = vmatprep.mubr.bf16.mxu0 0
        %986 = vmatmul.mubr.bf16.gmra.mxu0 %v952
        %v987 = vpop.f32.mrf.mxu0
        %v988 = vadd.f32 %v481, %v987
        %v989 = vpop.f32.mrf.mxu0
        %v990 = vpop.f32.mrf.mxu0
        %v991 = vpop.f32.mrf.mxu0
        %992 = vdwg.mxu0
        %v993 = vtanh.pop %v988
        %v994 = vmul.f32 %v949, %v993
        %v995 = vadd.f32 %v904, %v994
        %v996 = vpack.c.bf16 %v995, %v995
        %997 = vmatprep.subr.bf16.mxu0 0
        %998 = vmatpush1.bf16.msra.mxu0 %v522
        %999 = vmatprep.subr.bf16.mxu0 0
        %1000 = vmatpush1.bf16.msra.mxu0 %v521
        %1001 = vmatprep.subr.bf16.mxu0 0
        %1002 = vmatpush1.bf16.msra.mxu0 %v520
        %1003 = vmatprep.subr.bf16.mxu0 0
        %1004 = vmatpush1.bf16.msra.mxu0 %v519
        %1005 = vmatprep.subr.bf16.mxu0 0
        %1006 = vmatpush1.bf16.msra.mxu0 %v518
        %1007 = vmatprep.subr.bf16.mxu0 0
        %1008 = vmatpush1.bf16.msra.mxu0 %v517
        %1009 = vmatprep.subr.bf16.mxu0 0
        %1010 = vmatpush1.bf16.msra.mxu0 %v516
        %1011 = vmatprep.subr.bf16.mxu0 0
        %1012 = vmatpush1.bf16.msra.mxu0 %v515
        %1013 = vmatprep.subr.bf16.mxu0 0
        %1014 = vmatpush2.bf16.msra.mxu0 0
        %1015 = vmatprep.subr.bf16.mxu0 0
        %1016 = vmatpush2.bf16.msra.mxu0 0
        %1017 = vmatprep.subr.bf16.mxu0 0
        %1018 = vmatpush2.bf16.msra.mxu0 0
        %1019 = vmatprep.subr.bf16.mxu0 0
        %1020 = vmatpush2.bf16.msra.mxu0 0
        %1021 = vmatprep.subr.bf16.mxu0 0
        %1022 = vmatpush2.bf16.msra.mxu0 0
        %1023 = vmatprep.subr.bf16.mxu0 0
        %1024 = vmatpush2.bf16.msra.mxu0 0
        %1025 = vmatprep.subr.bf16.mxu0 0
        %1026 = vmatpush2.bf16.msra.mxu0 0
        %1027 = vmatprep.subr.bf16.mxu0 0
        %1028 = vmatpush2.bf16.msra.mxu0 0
        %1029 = vmatprep.mubr.bf16.mxu0 0
        %1030 = vmatmul.mubr.bf16.gmra.mxu0 %v996
        %v1031 = vpop.f32.mrf.mxu0
        %v1032 = vadd.f32 %v481, %v1031
        %v1033 = vpop.f32.mrf.mxu0
        %v1034 = vpop.f32.mrf.mxu0
        %v1035 = vpop.f32.mrf.mxu0
        %1036 = vdwg.mxu0
        %v1037 = vtanh.pop %v1032
        %v1038 = vstv %s905
        %v1039 = vmul.f32 %v1038, %v1037
        %v1040 = vadd.f32 %v904, %v1039
        %v1041 = vpack.c.bf16 %v1040, %v1040
        %1042 = vmatprep.subr.bf16.mxu0 0
        %1043 = vmatpush1.bf16.msra.mxu0 %v522
        %1044 = vmatprep.subr.bf16.mxu0 0
        %1045 = vmatpush1.bf16.msra.mxu0 %v521
        %1046 = vmatprep.subr.bf16.mxu0 0
        %1047 = vmatpush1.bf16.msra.mxu0 %v520
        %1048 = vmatprep.subr.bf16.mxu0 0
        %1049 = vmatpush1.bf16.msra.mxu0 %v519
        %1050 = vmatprep.subr.bf16.mxu0 0
        %1051 = vmatpush1.bf16.msra.mxu0 %v518
        %1052 = vmatprep.subr.bf16.mxu0 0
        %1053 = vmatpush1.bf16.msra.mxu0 %v517
        %1054 = vmatprep.subr.bf16.mxu0 0
        %1055 = vmatpush1.bf16.msra.mxu0 %v516
        %1056 = vmatprep.subr.bf16.mxu0 0
        %1057 = vmatpush1.bf16.msra.mxu0 %v515
        %1058 = vmatprep.subr.bf16.mxu0 0
        %1059 = vmatpush2.bf16.msra.mxu0 0
        %1060 = vmatprep.subr.bf16.mxu0 0
        %1061 = vmatpush2.bf16.msra.mxu0 0
        %1062 = vmatprep.subr.bf16.mxu0 0
        %1063 = vmatpush2.bf16.msra.mxu0 0
        %1064 = vmatprep.subr.bf16.mxu0 0
        %1065 = vmatpush2.bf16.msra.mxu0 0
        %1066 = vmatprep.subr.bf16.mxu0 0
        %1067 = vmatpush2.bf16.msra.mxu0 0
        %1068 = vmatprep.subr.bf16.mxu0 0
        %1069 = vmatpush2.bf16.msra.mxu0 0
        %1070 = vmatprep.subr.bf16.mxu0 0
        %1071 = vmatpush2.bf16.msra.mxu0 0
        %1072 = vmatprep.subr.bf16.mxu0 0
        %1073 = vmatpush2.bf16.msra.mxu0 0
        %1074 = vmatprep.mubr.bf16.mxu0 0
        %1075 = vmatmul.mubr.bf16.gmra.mxu0 %v1041
        %v1076 = vpop.f32.mrf.mxu0
        %v1077 = vadd.f32 %v481, %v1076
        %v1078 = vpop.f32.mrf.mxu0
        %v1079 = vpop.f32.mrf.mxu0
        %v1080 = vpop.f32.mrf.mxu0
        %1081 = vdwg.mxu0
        %v1082 = vtanh.pop %v1077
        %v1083 = vrcp.pop 6.0
        %s1084 = vtos %v1083
        %s1085 = smul.f32 %s905, %s1084
        %v1086 = vadd.f32 %v993, %v1037
        %v1087 = vmul.f32 %v1086, 2.0
        %v1088 = vadd.f32 %v947, %v1087
        %v1089 = vadd.f32 %v1088, %v1082
        %v1090 = vstv %s1085
        %v1091 = vmul.f32 %v1090, %v1089
        %v1092 = vadd.f32 %v904, %v1091
        %s1093 = sld [smem:[#allocation2 + $0x3]]
        %v1094 = vpack.c.bf16 %v1092, %v1092
        %1095 = vmatprep.subr.bf16.mxu0 0
        %1096 = vmatpush1.bf16.msra.mxu0 %v522
        %1097 = vmatprep.subr.bf16.mxu0 0
        %1098 = vmatpush1.bf16.msra.mxu0 %v521
        %1099 = vmatprep.subr.bf16.mxu0 0
        %1100 = vmatpush1.bf16.msra.mxu0 %v520
        %1101 = vmatprep.subr.bf16.mxu0 0
        %1102 = vmatpush1.bf16.msra.mxu0 %v519
        %1103 = vmatprep.subr.bf16.mxu0 0
        %1104 = vmatpush1.bf16.msra.mxu0 %v518
        %1105 = vmatprep.subr.bf16.mxu0 0
        %1106 = vmatpush1.bf16.msra.mxu0 %v517
        %1107 = vmatprep.subr.bf16.mxu0 0
        %1108 = vmatpush1.bf16.msra.mxu0 %v516
        %1109 = vmatprep.subr.bf16.mxu0 0
        %1110 = vmatpush1.bf16.msra.mxu0 %v515
        %1111 = vmatprep.subr.bf16.mxu0 0
        %1112 = vmatpush2.bf16.msra.mxu0 0
        %1113 = vmatprep.subr.bf16.mxu0 0
        %1114 = vmatpush2.bf16.msra.mxu0 0
        %1115 = vmatprep.subr.bf16.mxu0 0
        %1116 = vmatpush2.bf16.msra.mxu0 0
        %1117 = vmatprep.subr.bf16.mxu0 0
        %1118 = vmatpush2.bf16.msra.mxu0 0
        %1119 = vmatprep.subr.bf16.mxu0 0
        %1120 = vmatpush2.bf16.msra.mxu0 0
        %1121 = vmatprep.subr.bf16.mxu0 0
        %1122 = vmatpush2.bf16.msra.mxu0 0
        %1123 = vmatprep.subr.bf16.mxu0 0
        %1124 = vmatpush2.bf16.msra.mxu0 0
        %1125 = vmatprep.subr.bf16.mxu0 0
        %1126 = vmatpush2.bf16.msra.mxu0 0
        %1127 = vmatprep.mubr.bf16.mxu0 0
        %1128 = vmatmul.mubr.bf16.gmra.mxu0 %v1094
        %v1129 = vpop.f32.mrf.mxu0
        %v1130 = vadd.f32 %v481, %v1129
        %v1131 = vpop.f32.mrf.mxu0
        %v1132 = vpop.f32.mrf.mxu0
        %v1133 = vpop.f32.mrf.mxu0
        %1134 = vdwg.mxu0
        %v1135 = vtanh.pop %v1130
        %s1136 = smul.f32 %s1093, 0.5
        %v1137 = vstv %s1136
        %v1138 = vmul.f32 %v1137, %v1135
        %v1139 = vadd.f32 %v1092, %v1138
        %v1140 = vpack.c.bf16 %v1139, %v1139
        %1141 = vmatprep.subr.bf16.mxu0 0
        %1142 = vmatpush1.bf16.msra.mxu0 %v522
        %1143 = vmatprep.subr.bf16.mxu0 0
        %1144 = vmatpush1.bf16.msra.mxu0 %v521
        %1145 = vmatprep.subr.bf16.mxu0 0
        %1146 = vmatpush1.bf16.msra.mxu0 %v520
        %1147 = vmatprep.subr.bf16.mxu0 0
        %1148 = vmatpush1.bf16.msra.mxu0 %v519
        %1149 = vmatprep.subr.bf16.mxu0 0
        %1150 = vmatpush1.bf16.msra.mxu0 %v518
        %1151 = vmatprep.subr.bf16.mxu0 0
        %1152 = vmatpush1.bf16.msra.mxu0 %v517
        %1153 = vmatprep.subr.bf16.mxu0 0
        %1154 = vmatpush1.bf16.msra.mxu0 %v516
        %1155 = vmatprep.subr.bf16.mxu0 0
        %1156 = vmatpush1.bf16.msra.mxu0 %v515
        %1157 = vmatprep.subr.bf16.mxu0 0
        %1158 = vmatpush2.bf16.msra.mxu0 0
        %1159 = vmatprep.subr.bf16.mxu0 0
        %1160 = vmatpush2.bf16.msra.mxu0 0
        %1161 = vmatprep.subr.bf16.mxu0 0
        %1162 = vmatpush2.bf16.msra.mxu0 0
        %1163 = vmatprep.subr.bf16.mxu0 0
        %1164 = vmatpush2.bf16.msra.mxu0 0
        %1165 = vmatprep.subr.bf16.mxu0 0
        %1166 = vmatpush2.bf16.msra.mxu0 0
        %1167 = vmatprep.subr.bf16.mxu0 0
        %1168 = vmatpush2.bf16.msra.mxu0 0
        %1169 = vmatprep.subr.bf16.mxu0 0
        %1170 = vmatpush2.bf16.msra.mxu0 0
        %1171 = vmatprep.subr.bf16.mxu0 0
        %1172 = vmatpush2.bf16.msra.mxu0 0
        %1173 = vmatprep.mubr.bf16.mxu0 0
        %1174 = vmatmul.mubr.bf16.gmra.mxu0 %v1140
        %v1175 = vpop.f32.mrf.mxu0
        %v1176 = vadd.f32 %v481, %v1175
        %v1177 = vpop.f32.mrf.mxu0
        %v1178 = vpop.f32.mrf.mxu0
        %v1179 = vpop.f32.mrf.mxu0
        %1180 = vdwg.mxu0
        %v1181 = vtanh.pop %v1176
        %v1182 = vmul.f32 %v1137, %v1181
        %v1183 = vadd.f32 %v1092, %v1182
        %v1184 = vpack.c.bf16 %v1183, %v1183
        %1185 = vmatprep.subr.bf16.mxu0 0
        %1186 = vmatpush1.bf16.msra.mxu0 %v522
        %1187 = vmatprep.subr.bf16.mxu0 0
        %1188 = vmatpush1.bf16.msra.mxu0 %v521
        %1189 = vmatprep.subr.bf16.mxu0 0
        %1190 = vmatpush1.bf16.msra.mxu0 %v520
        %1191 = vmatprep.subr.bf16.mxu0 0
        %1192 = vmatpush1.bf16.msra.mxu0 %v519
        %1193 = vmatprep.subr.bf16.mxu0 0
        %1194 = vmatpush1.bf16.msra.mxu0 %v518
        %1195 = vmatprep.subr.bf16.mxu0 0
        %1196 = vmatpush1.bf16.msra.mxu0 %v517
        %1197 = vmatprep.subr.bf16.mxu0 0
        %1198 = vmatpush1.bf16.msra.mxu0 %v516
        %1199 = vmatprep.subr.bf16.mxu0 0
        %1200 = vmatpush1.bf16.msra.mxu0 %v515
        %1201 = vmatprep.subr.bf16.mxu0 0
        %1202 = vmatpush2.bf16.msra.mxu0 0
        %1203 = vmatprep.subr.bf16.mxu0 0
        %1204 = vmatpush2.bf16.msra.mxu0 0
        %1205 = vmatprep.subr.bf16.mxu0 0
        %1206 = vmatpush2.bf16.msra.mxu0 0
        %1207 = vmatprep.subr.bf16.mxu0 0
        %1208 = vmatpush2.bf16.msra.mxu0 0
        %1209 = vmatprep.subr.bf16.mxu0 0
        %1210 = vmatpush2.bf16.msra.mxu0 0
        %1211 = vmatprep.subr.bf16.mxu0 0
        %1212 = vmatpush2.bf16.msra.mxu0 0
        %1213 = vmatprep.subr.bf16.mxu0 0
        %1214 = vmatpush2.bf16.msra.mxu0 0
        %1215 = vmatprep.subr.bf16.mxu0 0
        %1216 = vmatpush2.bf16.msra.mxu0 0
        %1217 = vmatprep.mubr.bf16.mxu0 0
        %1218 = vmatmul.mubr.bf16.gmra.mxu0 %v1184
        %v1219 = vpop.f32.mrf.mxu0
        %v1220 = vadd.f32 %v481, %v1219
        %v1221 = vpop.f32.mrf.mxu0
        %v1222 = vpop.f32.mrf.mxu0
        %v1223 = vpop.f32.mrf.mxu0
        %1224 = vdwg.mxu0
        %v1225 = vtanh.pop %v1220
        %v1226 = vstv %s1093
        %v1227 = vmul.f32 %v1226, %v1225
        %v1228 = vadd.f32 %v1092, %v1227
        %v1229 = vpack.c.bf16 %v1228, %v1228
        %1230 = vmatprep.subr.bf16.mxu0 0
        %1231 = vmatpush1.bf16.msra.mxu0 %v522
        %1232 = vmatprep.subr.bf16.mxu0 0
        %1233 = vmatpush1.bf16.msra.mxu0 %v521
        %1234 = vmatprep.subr.bf16.mxu0 0
        %1235 = vmatpush1.bf16.msra.mxu0 %v520
        %1236 = vmatprep.subr.bf16.mxu0 0
        %1237 = vmatpush1.bf16.msra.mxu0 %v519
        %1238 = vmatprep.subr.bf16.mxu0 0
        %1239 = vmatpush1.bf16.msra.mxu0 %v518
        %1240 = vmatprep.subr.bf16.mxu0 0
        %1241 = vmatpush1.bf16.msra.mxu0 %v517
        %1242 = vmatprep.subr.bf16.mxu0 0
        %1243 = vmatpush1.bf16.msra.mxu0 %v516
        %1244 = vmatprep.subr.bf16.mxu0 0
        %1245 = vmatpush1.bf16.msra.mxu0 %v515
        %1246 = vmatprep.subr.bf16.mxu0 0
        %1247 = vmatpush2.bf16.msra.mxu0 0
        %1248 = vmatprep.subr.bf16.mxu0 0
        %1249 = vmatpush2.bf16.msra.mxu0 0
        %1250 = vmatprep.subr.bf16.mxu0 0
        %1251 = vmatpush2.bf16.msra.mxu0 0
        %1252 = vmatprep.subr.bf16.mxu0 0
        %1253 = vmatpush2.bf16.msra.mxu0 0
        %1254 = vmatprep.subr.bf16.mxu0 0
        %1255 = vmatpush2.bf16.msra.mxu0 0
        %1256 = vmatprep.subr.bf16.mxu0 0
        %1257 = vmatpush2.bf16.msra.mxu0 0
        %1258 = vmatprep.subr.bf16.mxu0 0
        %1259 = vmatpush2.bf16.msra.mxu0 0
        %1260 = vmatprep.subr.bf16.mxu0 0
        %1261 = vmatpush2.bf16.msra.mxu0 0
        %1262 = vmatprep.mubr.bf16.mxu0 0
        %1263 = vmatmul.mubr.bf16.gmra.mxu0 %v1229
        %v1264 = vpop.f32.mrf.mxu0
        %v1265 = vadd.f32 %v481, %v1264
        %v1266 = vpop.f32.mrf.mxu0
        %v1267 = vpop.f32.mrf.mxu0
        %v1268 = vpop.f32.mrf.mxu0
        %1269 = vdwg.mxu0
        %v1270 = vtanh.pop %v1265
        %v1271 = vrcp.pop 6.0
        %s1272 = vtos %v1271
        %s1273 = smul.f32 %s1093, %s1272
        %v1274 = vadd.f32 %v1181, %v1225
        %v1275 = vmul.f32 %v1274, 2.0
        %v1276 = vadd.f32 %v1135, %v1275
        %v1277 = vadd.f32 %v1276, %v1270
        %v1278 = vstv %s1273
        %v1279 = vmul.f32 %v1278, %v1277
        %v1280 = vadd.f32 %v1092, %v1279
        %s1281 = sld [smem:[#allocation2 + $0x4]]
        %v1282 = vpack.c.bf16 %v1280, %v1280
        %1283 = vmatprep.subr.bf16.mxu0 0
        %1284 = vmatpush1.bf16.msra.mxu0 %v522
        %1285 = vmatprep.subr.bf16.mxu0 0
        %1286 = vmatpush1.bf16.msra.mxu0 %v521
        %1287 = vmatprep.subr.bf16.mxu0 0
        %1288 = vmatpush1.bf16.msra.mxu0 %v520
        %1289 = vmatprep.subr.bf16.mxu0 0
        %1290 = vmatpush1.bf16.msra.mxu0 %v519
        %1291 = vmatprep.subr.bf16.mxu0 0
        %1292 = vmatpush1.bf16.msra.mxu0 %v518
        %1293 = vmatprep.subr.bf16.mxu0 0
        %1294 = vmatpush1.bf16.msra.mxu0 %v517
        %1295 = vmatprep.subr.bf16.mxu0 0
        %1296 = vmatpush1.bf16.msra.mxu0 %v516
        %1297 = vmatprep.subr.bf16.mxu0 0
        %1298 = vmatpush1.bf16.msra.mxu0 %v515
        %1299 = vmatprep.subr.bf16.mxu0 0
        %1300 = vmatpush2.bf16.msra.mxu0 0
        %1301 = vmatprep.subr.bf16.mxu0 0
        %1302 = vmatpush2.bf16.msra.mxu0 0
        %1303 = vmatprep.subr.bf16.mxu0 0
        %1304 = vmatpush2.bf16.msra.mxu0 0
        %1305 = vmatprep.subr.bf16.mxu0 0
        %1306 = vmatpush2.bf16.msra.mxu0 0
        %1307 = vmatprep.subr.bf16.mxu0 0
        %1308 = vmatpush2.bf16.msra.mxu0 0
        %1309 = vmatprep.subr.bf16.mxu0 0
        %1310 = vmatpush2.bf16.msra.mxu0 0
        %1311 = vmatprep.subr.bf16.mxu0 0
        %1312 = vmatpush2.bf16.msra.mxu0 0
        %1313 = vmatprep.subr.bf16.mxu0 0
        %1314 = vmatpush2.bf16.msra.mxu0 0
        %1315 = vmatprep.mubr.bf16.mxu0 0
        %1316 = vmatmul.mubr.bf16.gmra.mxu0 %v1282
        %v1317 = vpop.f32.mrf.mxu0
        %v1318 = vadd.f32 %v481, %v1317
        %v1319 = vpop.f32.mrf.mxu0
        %v1320 = vpop.f32.mrf.mxu0
        %v1321 = vpop.f32.mrf.mxu0
        %1322 = vdwg.mxu0
        %v1323 = vtanh.pop %v1318
        %s1324 = smul.f32 %s1281, 0.5
        %v1325 = vstv %s1324
        %v1326 = vmul.f32 %v1325, %v1323
        %v1327 = vadd.f32 %v1280, %v1326
        %v1328 = vpack.c.bf16 %v1327, %v1327
        %1329 = vmatprep.subr.bf16.mxu0 0
        %1330 = vmatpush1.bf16.msra.mxu0 %v522
        %1331 = vmatprep.subr.bf16.mxu0 0
        %1332 = vmatpush1.bf16.msra.mxu0 %v521
        %1333 = vmatprep.subr.bf16.mxu0 0
        %1334 = vmatpush1.bf16.msra.mxu0 %v520
        %1335 = vmatprep.subr.bf16.mxu0 0
        %1336 = vmatpush1.bf16.msra.mxu0 %v519
        %1337 = vmatprep.subr.bf16.mxu0 0
        %1338 = vmatpush1.bf16.msra.mxu0 %v518
        %1339 = vmatprep.subr.bf16.mxu0 0
        %1340 = vmatpush1.bf16.msra.mxu0 %v517
        %1341 = vmatprep.subr.bf16.mxu0 0
        %1342 = vmatpush1.bf16.msra.mxu0 %v516
        %1343 = vmatprep.subr.bf16.mxu0 0
        %1344 = vmatpush1.bf16.msra.mxu0 %v515
        %1345 = vmatprep.subr.bf16.mxu0 0
        %1346 = vmatpush2.bf16.msra.mxu0 0
        %1347 = vmatprep.subr.bf16.mxu0 0
        %1348 = vmatpush2.bf16.msra.mxu0 0
        %1349 = vmatprep.subr.bf16.mxu0 0
        %1350 = vmatpush2.bf16.msra.mxu0 0
        %1351 = vmatprep.subr.bf16.mxu0 0
        %1352 = vmatpush2.bf16.msra.mxu0 0
        %1353 = vmatprep.subr.bf16.mxu0 0
        %1354 = vmatpush2.bf16.msra.mxu0 0
        %1355 = vmatprep.subr.bf16.mxu0 0
        %1356 = vmatpush2.bf16.msra.mxu0 0
        %1357 = vmatprep.subr.bf16.mxu0 0
        %1358 = vmatpush2.bf16.msra.mxu0 0
        %1359 = vmatprep.subr.bf16.mxu0 0
        %1360 = vmatpush2.bf16.msra.mxu0 0
        %1361 = vmatprep.mubr.bf16.mxu0 0
        %1362 = vmatmul.mubr.bf16.gmra.mxu0 %v1328
        %v1363 = vpop.f32.mrf.mxu0
        %v1364 = vadd.f32 %v481, %v1363
        %v1365 = vpop.f32.mrf.mxu0
        %v1366 = vpop.f32.mrf.mxu0
        %v1367 = vpop.f32.mrf.mxu0
        %1368 = vdwg.mxu0
        %v1369 = vtanh.pop %v1364
        %v1370 = vmul.f32 %v1325, %v1369
        %v1371 = vadd.f32 %v1280, %v1370
        %v1372 = vpack.c.bf16 %v1371, %v1371
        %1373 = vmatprep.subr.bf16.mxu0 0
        %1374 = vmatpush1.bf16.msra.mxu0 %v522
        %1375 = vmatprep.subr.bf16.mxu0 0
        %1376 = vmatpush1.bf16.msra.mxu0 %v521
        %1377 = vmatprep.subr.bf16.mxu0 0
        %1378 = vmatpush1.bf16.msra.mxu0 %v520
        %1379 = vmatprep.subr.bf16.mxu0 0
        %1380 = vmatpush1.bf16.msra.mxu0 %v519
        %1381 = vmatprep.subr.bf16.mxu0 0
        %1382 = vmatpush1.bf16.msra.mxu0 %v518
        %1383 = vmatprep.subr.bf16.mxu0 0
        %1384 = vmatpush1.bf16.msra.mxu0 %v517
        %1385 = vmatprep.subr.bf16.mxu0 0
        %1386 = vmatpush1.bf16.msra.mxu0 %v516
        %1387 = vmatprep.subr.bf16.mxu0 0
        %1388 = vmatpush1.bf16.msra.mxu0 %v515
        %1389 = vmatprep.subr.bf16.mxu0 0
        %1390 = vmatpush2.bf16.msra.mxu0 0
        %1391 = vmatprep.subr.bf16.mxu0 0
        %1392 = vmatpush2.bf16.msra.mxu0 0
        %1393 = vmatprep.subr.bf16.mxu0 0
        %1394 = vmatpush2.bf16.msra.mxu0 0
        %1395 = vmatprep.subr.bf16.mxu0 0
        %1396 = vmatpush2.bf16.msra.mxu0 0
        %1397 = vmatprep.subr.bf16.mxu0 0
        %1398 = vmatpush2.bf16.msra.mxu0 0
        %1399 = vmatprep.subr.bf16.mxu0 0
        %1400 = vmatpush2.bf16.msra.mxu0 0
        %1401 = vmatprep.subr.bf16.mxu0 0
        %1402 = vmatpush2.bf16.msra.mxu0 0
        %1403 = vmatprep.subr.bf16.mxu0 0
        %1404 = vmatpush2.bf16.msra.mxu0 0
        %1405 = vmatprep.mubr.bf16.mxu0 0
        %1406 = vmatmul.mubr.bf16.gmra.mxu0 %v1372
        %v1407 = vpop.f32.mrf.mxu0
        %v1408 = vadd.f32 %v481, %v1407
        %v1409 = vpop.f32.mrf.mxu0
        %v1410 = vpop.f32.mrf.mxu0
        %v1411 = vpop.f32.mrf.mxu0
        %1412 = vdwg.mxu0
        %v1413 = vtanh.pop %v1408
        %v1414 = vstv %s1281
        %v1415 = vmul.f32 %v1414, %v1413
        %v1416 = vadd.f32 %v1280, %v1415
        %v1417 = vpack.c.bf16 %v1416, %v1416
        %1418 = vmatprep.subr.bf16.mxu0 0
        %1419 = vmatpush1.bf16.msra.mxu0 %v522
        %1420 = vmatprep.subr.bf16.mxu0 0
        %1421 = vmatpush1.bf16.msra.mxu0 %v521
        %1422 = vmatprep.subr.bf16.mxu0 0
        %1423 = vmatpush1.bf16.msra.mxu0 %v520
        %1424 = vmatprep.subr.bf16.mxu0 0
        %1425 = vmatpush1.bf16.msra.mxu0 %v519
        %1426 = vmatprep.subr.bf16.mxu0 0
        %1427 = vmatpush1.bf16.msra.mxu0 %v518
        %1428 = vmatprep.subr.bf16.mxu0 0
        %1429 = vmatpush1.bf16.msra.mxu0 %v517
        %1430 = vmatprep.subr.bf16.mxu0 0
        %1431 = vmatpush1.bf16.msra.mxu0 %v516
        %1432 = vmatprep.subr.bf16.mxu0 0
        %1433 = vmatpush1.bf16.msra.mxu0 %v515
        %1434 = vmatprep.subr.bf16.mxu0 0
        %1435 = vmatpush2.bf16.msra.mxu0 0
        %1436 = vmatprep.subr.bf16.mxu0 0
        %1437 = vmatpush2.bf16.msra.mxu0 0
        %1438 = vmatprep.subr.bf16.mxu0 0
        %1439 = vmatpush2.bf16.msra.mxu0 0
        %1440 = vmatprep.subr.bf16.mxu0 0
        %1441 = vmatpush2.bf16.msra.mxu0 0
        %1442 = vmatprep.subr.bf16.mxu0 0
        %1443 = vmatpush2.bf16.msra.mxu0 0
        %1444 = vmatprep.subr.bf16.mxu0 0
        %1445 = vmatpush2.bf16.msra.mxu0 0
        %1446 = vmatprep.subr.bf16.mxu0 0
        %1447 = vmatpush2.bf16.msra.mxu0 0
        %1448 = vmatprep.subr.bf16.mxu0 0
        %1449 = vmatpush2.bf16.msra.mxu0 0
        %1450 = vmatprep.mubr.bf16.mxu0 0
        %1451 = vmatmul.mubr.bf16.gmra.mxu0 %v1417
        %v1452 = vpop.f32.mrf.mxu0
        %v1453 = vadd.f32 %v481, %v1452
        %v1454 = vpop.f32.mrf.mxu0
        %v1455 = vpop.f32.mrf.mxu0
        %v1456 = vpop.f32.mrf.mxu0
        %1457 = vdwg.mxu0
        %v1458 = vtanh.pop %v1453
        %v1459 = vrcp.pop 6.0
        %s1460 = vtos %v1459
        %s1461 = smul.f32 %s1281, %s1460
        %v1462 = vadd.f32 %v1369, %v1413
        %v1463 = vmul.f32 %v1462, 2.0
        %v1464 = vadd.f32 %v1323, %v1463
        %v1465 = vadd.f32 %v1464, %v1458
        %v1466 = vstv %s1461
        %v1467 = vmul.f32 %v1466, %v1465
        %v1468 = vadd.f32 %v1280, %v1467
        %s1469 = sld [smem:[#allocation2 + $0x5]]
        %v1470 = vpack.c.bf16 %v1468, %v1468
        %1471 = vmatprep.subr.bf16.mxu0 0
        %1472 = vmatpush1.bf16.msra.mxu0 %v522
        %1473 = vmatprep.subr.bf16.mxu0 0
        %1474 = vmatpush1.bf16.msra.mxu0 %v521
        %1475 = vmatprep.subr.bf16.mxu0 0
        %1476 = vmatpush1.bf16.msra.mxu0 %v520
        %1477 = vmatprep.subr.bf16.mxu0 0
        %1478 = vmatpush1.bf16.msra.mxu0 %v519
        %1479 = vmatprep.subr.bf16.mxu0 0
        %1480 = vmatpush1.bf16.msra.mxu0 %v518
        %1481 = vmatprep.subr.bf16.mxu0 0
        %1482 = vmatpush1.bf16.msra.mxu0 %v517
        %1483 = vmatprep.subr.bf16.mxu0 0
        %1484 = vmatpush1.bf16.msra.mxu0 %v516
        %1485 = vmatprep.subr.bf16.mxu0 0
        %1486 = vmatpush1.bf16.msra.mxu0 %v515
        %1487 = vmatprep.subr.bf16.mxu0 0
        %1488 = vmatpush2.bf16.msra.mxu0 0
        %1489 = vmatprep.subr.bf16.mxu0 0
        %1490 = vmatpush2.bf16.msra.mxu0 0
        %1491 = vmatprep.subr.bf16.mxu0 0
        %1492 = vmatpush2.bf16.msra.mxu0 0
        %1493 = vmatprep.subr.bf16.mxu0 0
        %1494 = vmatpush2.bf16.msra.mxu0 0
        %1495 = vmatprep.subr.bf16.mxu0 0
        %1496 = vmatpush2.bf16.msra.mxu0 0
        %1497 = vmatprep.subr.bf16.mxu0 0
        %1498 = vmatpush2.bf16.msra.mxu0 0
        %1499 = vmatprep.subr.bf16.mxu0 0
        %1500 = vmatpush2.bf16.msra.mxu0 0
        %1501 = vmatprep.subr.bf16.mxu0 0
        %1502 = vmatpush2.bf16.msra.mxu0 0
        %1503 = vmatprep.mubr.bf16.mxu0 0
        %1504 = vmatmul.mubr.bf16.gmra.mxu0 %v1470
        %v1505 = vpop.f32.mrf.mxu0
        %v1506 = vadd.f32 %v481, %v1505
        %v1507 = vpop.f32.mrf.mxu0
        %v1508 = vpop.f32.mrf.mxu0
        %v1509 = vpop.f32.mrf.mxu0
        %1510 = vdwg.mxu0
        %v1511 = vtanh.pop %v1506
        %s1512 = smul.f32 %s1469, 0.5
        %v1513 = vstv %s1512
        %v1514 = vmul.f32 %v1513, %v1511
        %v1515 = vadd.f32 %v1468, %v1514
        %v1516 = vpack.c.bf16 %v1515, %v1515
        %1517 = vmatprep.subr.bf16.mxu0 0
        %1518 = vmatpush1.bf16.msra.mxu0 %v522
        %1519 = vmatprep.subr.bf16.mxu0 0
        %1520 = vmatpush1.bf16.msra.mxu0 %v521
        %1521 = vmatprep.subr.bf16.mxu0 0
        %1522 = vmatpush1.bf16.msra.mxu0 %v520
        %1523 = vmatprep.subr.bf16.mxu0 0
        %1524 = vmatpush1.bf16.msra.mxu0 %v519
        %1525 = vmatprep.subr.bf16.mxu0 0
        %1526 = vmatpush1.bf16.msra.mxu0 %v518
        %1527 = vmatprep.subr.bf16.mxu0 0
        %1528 = vmatpush1.bf16.msra.mxu0 %v517
        %1529 = vmatprep.subr.bf16.mxu0 0
        %1530 = vmatpush1.bf16.msra.mxu0 %v516
        %1531 = vmatprep.subr.bf16.mxu0 0
        %1532 = vmatpush1.bf16.msra.mxu0 %v515
        %1533 = vmatprep.subr.bf16.mxu0 0
        %1534 = vmatpush2.bf16.msra.mxu0 0
        %1535 = vmatprep.subr.bf16.mxu0 0
        %1536 = vmatpush2.bf16.msra.mxu0 0
        %1537 = vmatprep.subr.bf16.mxu0 0
        %1538 = vmatpush2.bf16.msra.mxu0 0
        %1539 = vmatprep.subr.bf16.mxu0 0
        %1540 = vmatpush2.bf16.msra.mxu0 0
        %1541 = vmatprep.subr.bf16.mxu0 0
        %1542 = vmatpush2.bf16.msra.mxu0 0
        %1543 = vmatprep.subr.bf16.mxu0 0
        %1544 = vmatpush2.bf16.msra.mxu0 0
        %1545 = vmatprep.subr.bf16.mxu0 0
        %1546 = vmatpush2.bf16.msra.mxu0 0
        %1547 = vmatprep.subr.bf16.mxu0 0
        %1548 = vmatpush2.bf16.msra.mxu0 0
        %1549 = vmatprep.mubr.bf16.mxu0 0
        %1550 = vmatmul.mubr.bf16.gmra.mxu0 %v1516
        %v1551 = vpop.f32.mrf.mxu0
        %v1552 = vadd.f32 %v481, %v1551
        %v1553 = vpop.f32.mrf.mxu0
        %v1554 = vpop.f32.mrf.mxu0
        %v1555 = vpop.f32.mrf.mxu0
        %1556 = vdwg.mxu0
        %v1557 = vtanh.pop %v1552
        %v1558 = vmul.f32 %v1513, %v1557
        %v1559 = vadd.f32 %v1468, %v1558
        %v1560 = vpack.c.bf16 %v1559, %v1559
        %1561 = vmatprep.subr.bf16.mxu0 0
        %1562 = vmatpush1.bf16.msra.mxu0 %v522
        %1563 = vmatprep.subr.bf16.mxu0 0
        %1564 = vmatpush1.bf16.msra.mxu0 %v521
        %1565 = vmatprep.subr.bf16.mxu0 0
        %1566 = vmatpush1.bf16.msra.mxu0 %v520
        %1567 = vmatprep.subr.bf16.mxu0 0
        %1568 = vmatpush1.bf16.msra.mxu0 %v519
        %1569 = vmatprep.subr.bf16.mxu0 0
        %1570 = vmatpush1.bf16.msra.mxu0 %v518
        %1571 = vmatprep.subr.bf16.mxu0 0
        %1572 = vmatpush1.bf16.msra.mxu0 %v517
        %1573 = vmatprep.subr.bf16.mxu0 0
        %1574 = vmatpush1.bf16.msra.mxu0 %v516
        %1575 = vmatprep.subr.bf16.mxu0 0
        %1576 = vmatpush1.bf16.msra.mxu0 %v515
        %1577 = vmatprep.subr.bf16.mxu0 0
        %1578 = vmatpush2.bf16.msra.mxu0 0
        %1579 = vmatprep.subr.bf16.mxu0 0
        %1580 = vmatpush2.bf16.msra.mxu0 0
        %1581 = vmatprep.subr.bf16.mxu0 0
        %1582 = vmatpush2.bf16.msra.mxu0 0
        %1583 = vmatprep.subr.bf16.mxu0 0
        %1584 = vmatpush2.bf16.msra.mxu0 0
        %1585 = vmatprep.subr.bf16.mxu0 0
        %1586 = vmatpush2.bf16.msra.mxu0 0
        %1587 = vmatprep.subr.bf16.mxu0 0
        %1588 = vmatpush2.bf16.msra.mxu0 0
        %1589 = vmatprep.subr.bf16.mxu0 0
        %1590 = vmatpush2.bf16.msra.mxu0 0
        %1591 = vmatprep.subr.bf16.mxu0 0
        %1592 = vmatpush2.bf16.msra.mxu0 0
        %1593 = vmatprep.mubr.bf16.mxu0 0
        %1594 = vmatmul.mubr.bf16.gmra.mxu0 %v1560
        %v1595 = vpop.f32.mrf.mxu0
        %v1596 = vadd.f32 %v481, %v1595
        %v1597 = vpop.f32.mrf.mxu0
        %v1598 = vpop.f32.mrf.mxu0
        %v1599 = vpop.f32.mrf.mxu0
        %1600 = vdwg.mxu0
        %v1601 = vtanh.pop %v1596
        %v1602 = vstv %s1469
        %v1603 = vmul.f32 %v1602, %v1601
        %v1604 = vadd.f32 %v1468, %v1603
        %v1605 = vpack.c.bf16 %v1604, %v1604
        %1606 = vmatprep.subr.bf16.mxu0 0
        %1607 = vmatpush1.bf16.msra.mxu0 %v522
        %1608 = vmatprep.subr.bf16.mxu0 0
        %1609 = vmatpush1.bf16.msra.mxu0 %v521
        %1610 = vmatprep.subr.bf16.mxu0 0
        %1611 = vmatpush1.bf16.msra.mxu0 %v520
        %1612 = vmatprep.subr.bf16.mxu0 0
        %1613 = vmatpush1.bf16.msra.mxu0 %v519
        %1614 = vmatprep.subr.bf16.mxu0 0
        %1615 = vmatpush1.bf16.msra.mxu0 %v518
        %1616 = vmatprep.subr.bf16.mxu0 0
        %1617 = vmatpush1.bf16.msra.mxu0 %v517
        %1618 = vmatprep.subr.bf16.mxu0 0
        %1619 = vmatpush1.bf16.msra.mxu0 %v516
        %1620 = vmatprep.subr.bf16.mxu0 0
        %1621 = vmatpush1.bf16.msra.mxu0 %v515
        %1622 = vmatprep.subr.bf16.mxu0 0
        %1623 = vmatpush2.bf16.msra.mxu0 0
        %1624 = vmatprep.subr.bf16.mxu0 0
        %1625 = vmatpush2.bf16.msra.mxu0 0
        %1626 = vmatprep.subr.bf16.mxu0 0
        %1627 = vmatpush2.bf16.msra.mxu0 0
        %1628 = vmatprep.subr.bf16.mxu0 0
        %1629 = vmatpush2.bf16.msra.mxu0 0
        %1630 = vmatprep.subr.bf16.mxu0 0
        %1631 = vmatpush2.bf16.msra.mxu0 0
        %1632 = vmatprep.subr.bf16.mxu0 0
        %1633 = vmatpush2.bf16.msra.mxu0 0
        %1634 = vmatprep.subr.bf16.mxu0 0
        %1635 = vmatpush2.bf16.msra.mxu0 0
        %1636 = vmatprep.subr.bf16.mxu0 0
        %1637 = vmatpush2.bf16.msra.mxu0 0
        %1638 = vmatprep.mubr.bf16.mxu0 0
        %1639 = vmatmul.mubr.bf16.gmra.mxu0 %v1605
        %v1640 = vpop.f32.mrf.mxu0
        %v1641 = vadd.f32 %v481, %v1640
        %v1642 = vpop.f32.mrf.mxu0
        %v1643 = vpop.f32.mrf.mxu0
        %v1644 = vpop.f32.mrf.mxu0
        %1645 = vdwg.mxu0
        %v1646 = vtanh.pop %v1641
        %v1647 = vrcp.pop 6.0
        %s1648 = vtos %v1647
        %s1649 = smul.f32 %s1469, %s1648
        %v1650 = vadd.f32 %v1557, %v1601
        %v1651 = vmul.f32 %v1650, 2.0
        %v1652 = vadd.f32 %v1511, %v1651
        %v1653 = vadd.f32 %v1652, %v1646
        %v1654 = vstv %s1649
        %v1655 = vmul.f32 %v1654, %v1653
        %v1656 = vadd.f32 %v1468, %v1655
        %s1657 = sld [smem:[#allocation2 + $0x6]]
        %v1658 = vpack.c.bf16 %v1656, %v1656
        %1659 = vmatprep.subr.bf16.mxu0 0
        %1660 = vmatpush1.bf16.msra.mxu0 %v522
        %1661 = vmatprep.subr.bf16.mxu0 0
        %1662 = vmatpush1.bf16.msra.mxu0 %v521
        %1663 = vmatprep.subr.bf16.mxu0 0
        %1664 = vmatpush1.bf16.msra.mxu0 %v520
        %1665 = vmatprep.subr.bf16.mxu0 0
        %1666 = vmatpush1.bf16.msra.mxu0 %v519
        %1667 = vmatprep.subr.bf16.mxu0 0
        %1668 = vmatpush1.bf16.msra.mxu0 %v518
        %1669 = vmatprep.subr.bf16.mxu0 0
        %1670 = vmatpush1.bf16.msra.mxu0 %v517
        %1671 = vmatprep.subr.bf16.mxu0 0
        %1672 = vmatpush1.bf16.msra.mxu0 %v516
        %1673 = vmatprep.subr.bf16.mxu0 0
        %1674 = vmatpush1.bf16.msra.mxu0 %v515
        %1675 = vmatprep.subr.bf16.mxu0 0
        %1676 = vmatpush2.bf16.msra.mxu0 0
        %1677 = vmatprep.subr.bf16.mxu0 0
        %1678 = vmatpush2.bf16.msra.mxu0 0
        %1679 = vmatprep.subr.bf16.mxu0 0
        %1680 = vmatpush2.bf16.msra.mxu0 0
        %1681 = vmatprep.subr.bf16.mxu0 0
        %1682 = vmatpush2.bf16.msra.mxu0 0
        %1683 = vmatprep.subr.bf16.mxu0 0
        %1684 = vmatpush2.bf16.msra.mxu0 0
        %1685 = vmatprep.subr.bf16.mxu0 0
        %1686 = vmatpush2.bf16.msra.mxu0 0
        %1687 = vmatprep.subr.bf16.mxu0 0
        %1688 = vmatpush2.bf16.msra.mxu0 0
        %1689 = vmatprep.subr.bf16.mxu0 0
        %1690 = vmatpush2.bf16.msra.mxu0 0
        %1691 = vmatprep.mubr.bf16.mxu0 0
        %1692 = vmatmul.mubr.bf16.gmra.mxu0 %v1658
        %v1693 = vpop.f32.mrf.mxu0
        %v1694 = vadd.f32 %v481, %v1693
        %v1695 = vpop.f32.mrf.mxu0
        %v1696 = vpop.f32.mrf.mxu0
        %v1697 = vpop.f32.mrf.mxu0
        %1698 = vdwg.mxu0
        %v1699 = vtanh.pop %v1694
        %s1700 = smul.f32 %s1657, 0.5
        %v1701 = vstv %s1700
        %v1702 = vmul.f32 %v1701, %v1699
        %v1703 = vadd.f32 %v1656, %v1702
        %v1704 = vpack.c.bf16 %v1703, %v1703
        %1705 = vmatprep.subr.bf16.mxu0 0
        %1706 = vmatpush1.bf16.msra.mxu0 %v522
        %1707 = vmatprep.subr.bf16.mxu0 0
        %1708 = vmatpush1.bf16.msra.mxu0 %v521
        %1709 = vmatprep.subr.bf16.mxu0 0
        %1710 = vmatpush1.bf16.msra.mxu0 %v520
        %1711 = vmatprep.subr.bf16.mxu0 0
        %1712 = vmatpush1.bf16.msra.mxu0 %v519
        %1713 = vmatprep.subr.bf16.mxu0 0
        %1714 = vmatpush1.bf16.msra.mxu0 %v518
        %1715 = vmatprep.subr.bf16.mxu0 0
        %1716 = vmatpush1.bf16.msra.mxu0 %v517
        %1717 = vmatprep.subr.bf16.mxu0 0
        %1718 = vmatpush1.bf16.msra.mxu0 %v516
        %1719 = vmatprep.subr.bf16.mxu0 0
        %1720 = vmatpush1.bf16.msra.mxu0 %v515
        %1721 = vmatprep.subr.bf16.mxu0 0
        %1722 = vmatpush2.bf16.msra.mxu0 0
        %1723 = vmatprep.subr.bf16.mxu0 0
        %1724 = vmatpush2.bf16.msra.mxu0 0
        %1725 = vmatprep.subr.bf16.mxu0 0
        %1726 = vmatpush2.bf16.msra.mxu0 0
        %1727 = vmatprep.subr.bf16.mxu0 0
        %1728 = vmatpush2.bf16.msra.mxu0 0
        %1729 = vmatprep.subr.bf16.mxu0 0
        %1730 = vmatpush2.bf16.msra.mxu0 0
        %1731 = vmatprep.subr.bf16.mxu0 0
        %1732 = vmatpush2.bf16.msra.mxu0 0
        %1733 = vmatprep.subr.bf16.mxu0 0
        %1734 = vmatpush2.bf16.msra.mxu0 0
        %1735 = vmatprep.subr.bf16.mxu0 0
        %1736 = vmatpush2.bf16.msra.mxu0 0
        %1737 = vmatprep.mubr.bf16.mxu0 0
        %1738 = vmatmul.mubr.bf16.gmra.mxu0 %v1704
        %v1739 = vpop.f32.mrf.mxu0
        %v1740 = vadd.f32 %v481, %v1739
        %v1741 = vpop.f32.mrf.mxu0
        %v1742 = vpop.f32.mrf.mxu0
        %v1743 = vpop.f32.mrf.mxu0
        %1744 = vdwg.mxu0
        %v1745 = vtanh.pop %v1740
        %v1746 = vmul.f32 %v1701, %v1745
        %v1747 = vadd.f32 %v1656, %v1746
        %v1748 = vpack.c.bf16 %v1747, %v1747
        %1749 = vmatprep.subr.bf16.mxu0 0
        %1750 = vmatpush1.bf16.msra.mxu0 %v522
        %1751 = vmatprep.subr.bf16.mxu0 0
        %1752 = vmatpush1.bf16.msra.mxu0 %v521
        %1753 = vmatprep.subr.bf16.mxu0 0
        %1754 = vmatpush1.bf16.msra.mxu0 %v520
        %1755 = vmatprep.subr.bf16.mxu0 0
        %1756 = vmatpush1.bf16.msra.mxu0 %v519
        %1757 = vmatprep.subr.bf16.mxu0 0
        %1758 = vmatpush1.bf16.msra.mxu0 %v518
        %1759 = vmatprep.subr.bf16.mxu0 0
        %1760 = vmatpush1.bf16.msra.mxu0 %v517
        %1761 = vmatprep.subr.bf16.mxu0 0
        %1762 = vmatpush1.bf16.msra.mxu0 %v516
        %1763 = vmatprep.subr.bf16.mxu0 0
        %1764 = vmatpush1.bf16.msra.mxu0 %v515
        %1765 = vmatprep.subr.bf16.mxu0 0
        %1766 = vmatpush2.bf16.msra.mxu0 0
        %1767 = vmatprep.subr.bf16.mxu0 0
        %1768 = vmatpush2.bf16.msra.mxu0 0
        %1769 = vmatprep.subr.bf16.mxu0 0
        %1770 = vmatpush2.bf16.msra.mxu0 0
        %1771 = vmatprep.subr.bf16.mxu0 0
        %1772 = vmatpush2.bf16.msra.mxu0 0
        %1773 = vmatprep.subr.bf16.mxu0 0
        %1774 = vmatpush2.bf16.msra.mxu0 0
        %1775 = vmatprep.subr.bf16.mxu0 0
        %1776 = vmatpush2.bf16.msra.mxu0 0
        %1777 = vmatprep.subr.bf16.mxu0 0
        %1778 = vmatpush2.bf16.msra.mxu0 0
        %1779 = vmatprep.subr.bf16.mxu0 0
        %1780 = vmatpush2.bf16.msra.mxu0 0
        %1781 = vmatprep.mubr.bf16.mxu0 0
        %1782 = vmatmul.mubr.bf16.gmra.mxu0 %v1748
        %v1783 = vpop.f32.mrf.mxu0
        %v1784 = vadd.f32 %v481, %v1783
        %v1785 = vpop.f32.mrf.mxu0
        %v1786 = vpop.f32.mrf.mxu0
        %v1787 = vpop.f32.mrf.mxu0
        %1788 = vdwg.mxu0
        %v1789 = vtanh.pop %v1784
        %v1790 = vstv %s1657
        %v1791 = vmul.f32 %v1790, %v1789
        %v1792 = vadd.f32 %v1656, %v1791
        %v1793 = vpack.c.bf16 %v1792, %v1792
        %1794 = vmatprep.subr.bf16.mxu0 0
        %1795 = vmatpush1.bf16.msra.mxu0 %v522
        %1796 = vmatprep.subr.bf16.mxu0 0
        %1797 = vmatpush1.bf16.msra.mxu0 %v521
        %1798 = vmatprep.subr.bf16.mxu0 0
        %1799 = vmatpush1.bf16.msra.mxu0 %v520
        %1800 = vmatprep.subr.bf16.mxu0 0
        %1801 = vmatpush1.bf16.msra.mxu0 %v519
        %1802 = vmatprep.subr.bf16.mxu0 0
        %1803 = vmatpush1.bf16.msra.mxu0 %v518
        %1804 = vmatprep.subr.bf16.mxu0 0
        %1805 = vmatpush1.bf16.msra.mxu0 %v517
        %1806 = vmatprep.subr.bf16.mxu0 0
        %1807 = vmatpush1.bf16.msra.mxu0 %v516
        %1808 = vmatprep.subr.bf16.mxu0 0
        %1809 = vmatpush1.bf16.msra.mxu0 %v515
        %1810 = vmatprep.subr.bf16.mxu0 0
        %1811 = vmatpush2.bf16.msra.mxu0 0
        %1812 = vmatprep.subr.bf16.mxu0 0
        %1813 = vmatpush2.bf16.msra.mxu0 0
        %1814 = vmatprep.subr.bf16.mxu0 0
        %1815 = vmatpush2.bf16.msra.mxu0 0
        %1816 = vmatprep.subr.bf16.mxu0 0
        %1817 = vmatpush2.bf16.msra.mxu0 0
        %1818 = vmatprep.subr.bf16.mxu0 0
        %1819 = vmatpush2.bf16.msra.mxu0 0
        %1820 = vmatprep.subr.bf16.mxu0 0
        %1821 = vmatpush2.bf16.msra.mxu0 0
        %1822 = vmatprep.subr.bf16.mxu0 0
        %1823 = vmatpush2.bf16.msra.mxu0 0
        %1824 = vmatprep.subr.bf16.mxu0 0
        %1825 = vmatpush2.bf16.msra.mxu0 0
        %1826 = vmatprep.mubr.bf16.mxu0 0
        %1827 = vmatmul.mubr.bf16.gmra.mxu0 %v1793
        %v1828 = vpop.f32.mrf.mxu0
        %v1829 = vadd.f32 %v481, %v1828
        %v1830 = vpop.f32.mrf.mxu0
        %v1831 = vpop.f32.mrf.mxu0
        %v1832 = vpop.f32.mrf.mxu0
        %1833 = vdwg.mxu0
        %v1834 = vtanh.pop %v1829
        %v1835 = vrcp.pop 6.0
        %s1836 = vtos %v1835
        %s1837 = smul.f32 %s1657, %s1836
        %v1838 = vadd.f32 %v1745, %v1789
        %v1839 = vmul.f32 %v1838, 2.0
        %v1840 = vadd.f32 %v1699, %v1839
        %v1841 = vadd.f32 %v1840, %v1834
        %v1842 = vstv %s1837
        %v1843 = vmul.f32 %v1842, %v1841
        %v1844 = vadd.f32 %v1656, %v1843
        %s1845 = sld [smem:[#allocation2 + $0x7]]
        %v1846 = vpack.c.bf16 %v1844, %v1844
        %1847 = vmatprep.subr.bf16.mxu0 0
        %1848 = vmatpush1.bf16.msra.mxu0 %v522
        %1849 = vmatprep.subr.bf16.mxu0 0
        %1850 = vmatpush1.bf16.msra.mxu0 %v521
        %1851 = vmatprep.subr.bf16.mxu0 0
        %1852 = vmatpush1.bf16.msra.mxu0 %v520
        %1853 = vmatprep.subr.bf16.mxu0 0
        %1854 = vmatpush1.bf16.msra.mxu0 %v519
        %1855 = vmatprep.subr.bf16.mxu0 0
        %1856 = vmatpush1.bf16.msra.mxu0 %v518
        %1857 = vmatprep.subr.bf16.mxu0 0
        %1858 = vmatpush1.bf16.msra.mxu0 %v517
        %1859 = vmatprep.subr.bf16.mxu0 0
        %1860 = vmatpush1.bf16.msra.mxu0 %v516
        %1861 = vmatprep.subr.bf16.mxu0 0
        %1862 = vmatpush1.bf16.msra.mxu0 %v515
        %1863 = vmatprep.subr.bf16.mxu0 0
        %1864 = vmatpush2.bf16.msra.mxu0 0
        %1865 = vmatprep.subr.bf16.mxu0 0
        %1866 = vmatpush2.bf16.msra.mxu0 0
        %1867 = vmatprep.subr.bf16.mxu0 0
        %1868 = vmatpush2.bf16.msra.mxu0 0
        %1869 = vmatprep.subr.bf16.mxu0 0
        %1870 = vmatpush2.bf16.msra.mxu0 0
        %1871 = vmatprep.subr.bf16.mxu0 0
        %1872 = vmatpush2.bf16.msra.mxu0 0
        %1873 = vmatprep.subr.bf16.mxu0 0
        %1874 = vmatpush2.bf16.msra.mxu0 0
        %1875 = vmatprep.subr.bf16.mxu0 0
        %1876 = vmatpush2.bf16.msra.mxu0 0
        %1877 = vmatprep.subr.bf16.mxu0 0
        %1878 = vmatpush2.bf16.msra.mxu0 0
        %1879 = vmatprep.mubr.bf16.mxu0 0
        %1880 = vmatmul.mubr.bf16.gmra.mxu0 %v1846
        %v1881 = vpop.f32.mrf.mxu0
        %v1882 = vadd.f32 %v481, %v1881
        %v1883 = vpop.f32.mrf.mxu0
        %v1884 = vpop.f32.mrf.mxu0
        %v1885 = vpop.f32.mrf.mxu0
        %1886 = vdwg.mxu0
        %v1887 = vtanh.pop %v1882
        %s1888 = smul.f32 %s1845, 0.5
        %v1889 = vstv %s1888
        %v1890 = vmul.f32 %v1889, %v1887
        %v1891 = vadd.f32 %v1844, %v1890
        %v1892 = vpack.c.bf16 %v1891, %v1891
        %1893 = vmatprep.subr.bf16.mxu0 0
        %1894 = vmatpush1.bf16.msra.mxu0 %v522
        %1895 = vmatprep.subr.bf16.mxu0 0
        %1896 = vmatpush1.bf16.msra.mxu0 %v521
        %1897 = vmatprep.subr.bf16.mxu0 0
        %1898 = vmatpush1.bf16.msra.mxu0 %v520
        %1899 = vmatprep.subr.bf16.mxu0 0
        %1900 = vmatpush1.bf16.msra.mxu0 %v519
        %1901 = vmatprep.subr.bf16.mxu0 0
        %1902 = vmatpush1.bf16.msra.mxu0 %v518
        %1903 = vmatprep.subr.bf16.mxu0 0
        %1904 = vmatpush1.bf16.msra.mxu0 %v517
        %1905 = vmatprep.subr.bf16.mxu0 0
        %1906 = vmatpush1.bf16.msra.mxu0 %v516
        %1907 = vmatprep.subr.bf16.mxu0 0
        %1908 = vmatpush1.bf16.msra.mxu0 %v515
        %1909 = vmatprep.subr.bf16.mxu0 0
        %1910 = vmatpush2.bf16.msra.mxu0 0
        %1911 = vmatprep.subr.bf16.mxu0 0
        %1912 = vmatpush2.bf16.msra.mxu0 0
        %1913 = vmatprep.subr.bf16.mxu0 0
        %1914 = vmatpush2.bf16.msra.mxu0 0
        %1915 = vmatprep.subr.bf16.mxu0 0
        %1916 = vmatpush2.bf16.msra.mxu0 0
        %1917 = vmatprep.subr.bf16.mxu0 0
        %1918 = vmatpush2.bf16.msra.mxu0 0
        %1919 = vmatprep.subr.bf16.mxu0 0
        %1920 = vmatpush2.bf16.msra.mxu0 0
        %1921 = vmatprep.subr.bf16.mxu0 0
        %1922 = vmatpush2.bf16.msra.mxu0 0
        %1923 = vmatprep.subr.bf16.mxu0 0
        %1924 = vmatpush2.bf16.msra.mxu0 0
        %1925 = vmatprep.mubr.bf16.mxu0 0
        %1926 = vmatmul.mubr.bf16.gmra.mxu0 %v1892
        %v1927 = vpop.f32.mrf.mxu0
        %v1928 = vadd.f32 %v481, %v1927
        %v1929 = vpop.f32.mrf.mxu0
        %v1930 = vpop.f32.mrf.mxu0
        %v1931 = vpop.f32.mrf.mxu0
        %1932 = vdwg.mxu0
        %v1933 = vtanh.pop %v1928
        %v1934 = vmul.f32 %v1889, %v1933
        %v1935 = vadd.f32 %v1844, %v1934
        %v1936 = vpack.c.bf16 %v1935, %v1935
        %1937 = vmatprep.subr.bf16.mxu0 0
        %1938 = vmatpush1.bf16.msra.mxu0 %v522
        %1939 = vmatprep.subr.bf16.mxu0 0
        %1940 = vmatpush1.bf16.msra.mxu0 %v521
        %1941 = vmatprep.subr.bf16.mxu0 0
        %1942 = vmatpush1.bf16.msra.mxu0 %v520
        %1943 = vmatprep.subr.bf16.mxu0 0
        %1944 = vmatpush1.bf16.msra.mxu0 %v519
        %1945 = vmatprep.subr.bf16.mxu0 0
        %1946 = vmatpush1.bf16.msra.mxu0 %v518
        %1947 = vmatprep.subr.bf16.mxu0 0
        %1948 = vmatpush1.bf16.msra.mxu0 %v517
        %1949 = vmatprep.subr.bf16.mxu0 0
        %1950 = vmatpush1.bf16.msra.mxu0 %v516
        %1951 = vmatprep.subr.bf16.mxu0 0
        %1952 = vmatpush1.bf16.msra.mxu0 %v515
        %1953 = vmatprep.subr.bf16.mxu0 0
        %1954 = vmatpush2.bf16.msra.mxu0 0
        %1955 = vmatprep.subr.bf16.mxu0 0
        %1956 = vmatpush2.bf16.msra.mxu0 0
        %1957 = vmatprep.subr.bf16.mxu0 0
        %1958 = vmatpush2.bf16.msra.mxu0 0
        %1959 = vmatprep.subr.bf16.mxu0 0
        %1960 = vmatpush2.bf16.msra.mxu0 0
        %1961 = vmatprep.subr.bf16.mxu0 0
        %1962 = vmatpush2.bf16.msra.mxu0 0
        %1963 = vmatprep.subr.bf16.mxu0 0
        %1964 = vmatpush2.bf16.msra.mxu0 0
        %1965 = vmatprep.subr.bf16.mxu0 0
        %1966 = vmatpush2.bf16.msra.mxu0 0
        %1967 = vmatprep.subr.bf16.mxu0 0
        %1968 = vmatpush2.bf16.msra.mxu0 0
        %1969 = vmatprep.mubr.bf16.mxu0 0
        %1970 = vmatmul.mubr.bf16.gmra.mxu0 %v1936
        %v1971 = vpop.f32.mrf.mxu0
        %v1972 = vadd.f32 %v481, %v1971
        %v1973 = vpop.f32.mrf.mxu0
        %v1974 = vpop.f32.mrf.mxu0
        %v1975 = vpop.f32.mrf.mxu0
        %1976 = vdwg.mxu0
        %v1977 = vtanh.pop %v1972
        %v1978 = vstv %s1845
        %v1979 = vmul.f32 %v1978, %v1977
        %v1980 = vadd.f32 %v1844, %v1979
        %v1981 = vpack.c.bf16 %v1980, %v1980
        %1982 = vmatprep.subr.bf16.mxu0 0
        %1983 = vmatpush1.bf16.msra.mxu0 %v522
        %1984 = vmatprep.subr.bf16.mxu0 0
        %1985 = vmatpush1.bf16.msra.mxu0 %v521
        %1986 = vmatprep.subr.bf16.mxu0 0
        %1987 = vmatpush1.bf16.msra.mxu0 %v520
        %1988 = vmatprep.subr.bf16.mxu0 0
        %1989 = vmatpush1.bf16.msra.mxu0 %v519
        %1990 = vmatprep.subr.bf16.mxu0 0
        %1991 = vmatpush1.bf16.msra.mxu0 %v518
        %1992 = vmatprep.subr.bf16.mxu0 0
        %1993 = vmatpush1.bf16.msra.mxu0 %v517
        %1994 = vmatprep.subr.bf16.mxu0 0
        %1995 = vmatpush1.bf16.msra.mxu0 %v516
        %1996 = vmatprep.subr.bf16.mxu0 0
        %1997 = vmatpush1.bf16.msra.mxu0 %v515
        %1998 = vmatprep.subr.bf16.mxu0 0
        %1999 = vmatpush2.bf16.msra.mxu0 0
        %2000 = vmatprep.subr.bf16.mxu0 0
        %2001 = vmatpush2.bf16.msra.mxu0 0
        %2002 = vmatprep.subr.bf16.mxu0 0
        %2003 = vmatpush2.bf16.msra.mxu0 0
        %2004 = vmatprep.subr.bf16.mxu0 0
        %2005 = vmatpush2.bf16.msra.mxu0 0
        %2006 = vmatprep.subr.bf16.mxu0 0
        %2007 = vmatpush2.bf16.msra.mxu0 0
        %2008 = vmatprep.subr.bf16.mxu0 0
        %2009 = vmatpush2.bf16.msra.mxu0 0
        %2010 = vmatprep.subr.bf16.mxu0 0
        %2011 = vmatpush2.bf16.msra.mxu0 0
        %2012 = vmatprep.subr.bf16.mxu0 0
        %2013 = vmatpush2.bf16.msra.mxu0 0
        %2014 = vmatprep.mubr.bf16.mxu0 0
        %2015 = vmatmul.mubr.bf16.gmra.mxu0 %v1981
        %v2016 = vpop.f32.mrf.mxu0
        %v2017 = vadd.f32 %v481, %v2016
        %v2018 = vpop.f32.mrf.mxu0
        %v2019 = vpop.f32.mrf.mxu0
        %v2020 = vpop.f32.mrf.mxu0
        %2021 = vdwg.mxu0
        %v2022 = vtanh.pop %v2017
        %v2023 = vrcp.pop 6.0
        %s2024 = vtos %v2023
        %s2025 = smul.f32 %s1845, %s2024
        %v2026 = vadd.f32 %v1933, %v1977
        %v2027 = vmul.f32 %v2026, 2.0
        %v2028 = vadd.f32 %v1887, %v2027
        %v2029 = vadd.f32 %v2028, %v2022
        %v2030 = vstv %s2025
        %v2031 = vmul.f32 %v2030, %v2029
        %v2032 = vadd.f32 %v1844, %v2031
        %2033 = vst [vmem:[%s447] sm:$0xff] %v2032
        %s2034 = sand.u32 %s222, 1
        %s2035 = scalar_lea.sflag [#allocation4], %s2034
        %s2036 = sand.u32 %s222, 1
        %s2037 = smul.addr %s2036, 8
        %s2038 = scalar_lea.vmem [#allocation13], %s2037
        // Predicated region
        $region73: #{tpu_custom_call.1} parent=47 // pred_check
          %p2039 = pneg %p232
        $region74: #{tpu_custom_call.1} parent=47 // pred_check_branch
          %2041 = sbr.rel (%p2039) target = $region76
        $region75: #{tpu_custom_call.1} parent=47 // pred_region
          %s2043 = ssub.s32 128, 128
          %2044 = vsyncadd %s2035, %s2043
          %s2045 = smul.addr %s35, 2
          %s2046 = sadd.s32 %s36, %s2045
          %s2047 = smul.addr %s2046, 128
          %s2048 = scalar_lea.hbm %s7, %s2047
          %s2050 = sshll.u32 %s2038, 4
          %s2051 = int_to_ptr.vmem [resolvable:$true] %s2050
          %2053 = dma.vmem_to_hbm [thread:$0]  %s2051, 128, %s2048, %s2035
        $region76: #{tpu_custom_call.1} parent=47 // pred_fallthru
          _
      $region48: #{tpu_custom_call.1} parent=5 // pred_fallthru
        _
      %p2054 = scmp.le.s32.totalorder 2, %s26
      // Predicated region
      $region77: #{tpu_custom_call.1} parent=5 // pred_check
        %p2055 = pneg %p2054
      $region78: #{tpu_custom_call.1} parent=5 // pred_check_branch
        %2057 = sbr.rel (%p2055) target = $region80
      $region79: #{tpu_custom_call.1} parent=5 // pred_region
        %s2058 = ssub.s32 %s26, 2
        // Predicated region
        $region81: #{tpu_custom_call.1} parent=79 // pred_check
          %p2059 = pneg %p238
        $region82: #{tpu_custom_call.1} parent=79 // pred_check_branch
          %2061 = sbr.rel (%p2059) target = $region84
        $region83: #{tpu_custom_call.1} parent=79 // pred_region
          %s2062 = sand.u32 %s223, 1
          %s2063 = scalar_lea.sflag [#allocation4], %s2062
          %s2064 = sand.u32 %s223, 1
          %s2065 = smul.addr %s2064, 8
          %s2066 = scalar_lea.vmem [#allocation13], %s2065
          %2067 = dma.done %s2063, 128
        $region84: #{tpu_custom_call.1} parent=79 // pred_fallthru
          _
      $region80: #{tpu_custom_call.1} parent=5 // pred_fallthru
        _
    $region6: #{tpu_custom_call.1} parent=1 // loop_footer
      %s30 = sadd.s32 1, %s26
    $region7: #{tpu_custom_call.1} parent=1 // loop_footer_branch
      %25 = sbr.rel target = $region3
    $region8: #{tpu_custom_call.1} parent=1 // loop_exit
      _
    %2068 = vsyncpa [#allocation3], 1
    %s2069 = scalar_lea.sflag [#allocation3], 1
    %2070 = vsyncpa %s2069, 1
    %2071 = vsyncpa [#allocation8], 1
    %s2072 = scalar_lea.sflag [#allocation8], 1
    %2073 = vsyncpa %s2072, 1
    %2074 = vsyncpa [#allocation11], 1
    %s2075 = scalar_lea.sflag [#allocation11], 1
    %2076 = vsyncpa %s2075, 1
    %2077 = vsyncpa [#allocation4], 1
    %s2078 = scalar_lea.sflag [#allocation4], 1
    %2079 = vsyncpa %s2078, 1
    %2080 = vsyncpa [#allocation5], 1
    %s2081 = scalar_lea.sflag [#allocation5], 1
    %2082 = vsyncpa %s2081, 1

</llo_original>
